<compile_context>
chip_gen: v5e
topology: v5e:2x2
jax: 0.10.0
libtpu: 0.0.40
codegen_flags: <defaults>
</compile_context>

<pallas_src>
import functools

import jax
import jax.numpy as jnp
from jax.experimental import pallas as pl
from jax.experimental.pallas import tpu as pltpu

BN_EPS = 1e-5


# --------------------------------------------------------------------------- #
# Pallas kernels
# --------------------------------------------------------------------------- #
def _conv3x3_bn_act_kernel(x_ref, w_ref, scale_ref, shift_ref, o_ref, xp_ref,
                           *pool_scratch, h, w, pad_rows, act, pool):
    """Fused 3x3 conv (pad=1) + folded-BN affine + activation (+ 2x2 maxpool).

    Grid = (cout_tile j, image b).  Per step:
      x_ref:     (h*w, cin)       bf16  one image, flat row-major NHWC rows
      w_ref:     (9, cin, tcout)  bf16  weight taps (tap index = 3*dh + dw)
      scale_ref: (1, tcout)       f32   folded BN scale
      shift_ref: (1, tcout)       f32   folded BN shift (+ conv bias)
      o_ref:     (h*w, tcout)  or (h//2, w//2, tcout) when pool=True
      xp_ref:    (h*w + 2*pad_rows, cin) bf16 scratch; zero pad rows top/bottom
                 turn every tap into a plain shifted flat-window read.
      pool_scratch[0]: (h//2, w, tcout) f32 scratch (only when pool=True)
    """
    hw = h * w
    cin = x_ref.shape[-1]
    tcout = o_ref.shape[-1]

    # ---- stage this image into the zero-padded bf16 VMEM scratch ---------- #
    xp_ref[...] = jnp.zeros(xp_ref.shape, xp_ref.dtype)
    xp_ref[pl.ds(pad_rows, hw), :] = x_ref[...]

    # ---- horizontal-edge masks (built in-kernel; nothing read from HBM) --- #
    col = jax.lax.broadcasted_iota(jnp.int32, (hw, 1), 0) % w
    lmask = col > 0            # left-neighbour taps invalid at column 0
    rmask = col < (w - 1)      # right-neighbour taps invalid at column w-1

    # ---- 9 shifted-window bf16 MXU matmuls into an f32 accumulator -------- #
    acc = jnp.zeros((hw, tcout), jnp.float32)
    for dh in range(3):
        for dw in range(3):
            delta = (dh - 1) * w + (dw - 1)
            xs = xp_ref[pl.ds(pad_rows + delta, hw), :]
            if dw == 0:
                xs = jnp.where(lmask, xs, 0)
            elif dw == 2:
                xs = jnp.where(rmask, xs, 0)
            acc = acc + jnp.dot(xs, w_ref[3 * dh + dw],
                                preferred_element_type=jnp.float32)

    # ---- folded-BN affine + activation epilogue ---------------------------- #
    y = acc * scale_ref[...] + shift_ref[...]
    if act == "relu":
        y = jnp.maximum(y, 0.0)
    elif act == "sigmoid":
        y = 1.0 / (1.0 + jnp.exp(-y))   # exact: keeps the [0,1] output contract

    if pool:
        prow = pool_scratch[0]
        y4 = y.reshape(h // 2, 2, w, tcout)            # layout-preserving split
        prow[...] = jnp.maximum(y4[:, 0], y4[:, 1])    # row-pair max
        left = prow[:, pl.ds(0, w // 2, 2), :]         # even columns (strided)
        right = prow[:, pl.ds(1, w // 2, 2), :]        # odd columns  (strided)
        o_ref[...] = jnp.maximum(left, right).astype(o_ref.dtype)
    else:
        o_ref[...] = y.astype(o_ref.dtype)


def _matmul_bn_act_kernel(a_ref, b_ref, scale_ref, shift_ref, o_ref, *, act):
    # (M, K) bf16 @ (K, TN) bf16 -> f32 accumulate + fused affine/activation.
    y = jnp.dot(a_ref[...], b_ref[...], preferred_element_type=jnp.float32)
    y = y * scale_ref[...] + shift_ref[...]
    if act == "relu":
        y = jnp.maximum(y, 0.0)
    elif act == "sigmoid":
        y = 1.0 / (1.0 + jnp.exp(-y))
    o_ref[...] = y.astype(o_ref.dtype)


def _maxpool2x2_kernel(x_ref, o_ref, tmp_ref):
    # x_ref: (h, w, c) bf16; o_ref: (h//2, w//2, c); tmp_ref: (h//2, w, c) f32.
    h, w, c = x_ref.shape
    ho, wo = h // 2, w // 2
    xv = x_ref[...].reshape(ho, 2, w, c).astype(jnp.float32)   # leading split
    tmp_ref[...] = jnp.maximum(xv[:, 0], xv[:, 1])
    left = tmp_ref[:, pl.ds(0, wo, 2), :]
    right = tmp_ref[:, pl.ds(1, wo, 2), :]
    o_ref[...] = jnp.maximum(left, right).astype(o_ref.dtype)


# --------------------------------------------------------------------------- #
# Wrappers (grids / BlockSpecs / layout glue)
# --------------------------------------------------------------------------- #
def conv3x3_bn_act(x, w9, scale, shift, h, w, act, pool=False,
                   out_dtype=jnp.bfloat16):
    """x: (n, h*w, cin) bf16 -> (n, ho*wo, cout) out_dtype."""
    n, hw, cin = x.shape
    cout = w9.shape[-1]
    if cout % 256 == 0:
        tcout = 256                    # 256-wide N tiles fill the v6e/v7x MXU
    elif cout % 128 == 0:
        tcout = 128
    else:
        tcout = cout
    nblk = cout // tcout
    pad_rows = ((w + 1 + 15) // 16) * 16   # >= w+1 and bf16 sublane aligned
    ho, wo = (h // 2, w // 2) if pool else (h, w)

    kernel = functools.partial(_conv3x3_bn_act_kernel, h=h, w=w,
                               pad_rows=pad_rows, act=act, pool=pool)
    scratch = [pltpu.VMEM((hw + 2 * pad_rows, cin), jnp.bfloat16)]
    if pool:
        scratch.append(pltpu.VMEM((h // 2, w, tcout), jnp.float32))
        out_shape = jax.ShapeDtypeStruct((n, ho, wo, cout), out_dtype)
        out_spec = pl.BlockSpec((None, ho, wo, tcout), lambda j, b: (b, 0, 0, j))
    else:
        out_shape = jax.ShapeDtypeStruct((n, hw, cout), out_dtype)
        out_spec = pl.BlockSpec((None, hw, tcout), lambda j, b: (b, 0, j))

    out_bytes = jnp.dtype(out_dtype).itemsize
    y = pl.pallas_call(
        kernel,
        out_shape=out_shape,
        grid=(nblk, n),
        in_specs=[
            pl.BlockSpec((None, hw, cin), lambda j, b: (b, 0, 0)),
            pl.BlockSpec((9, cin, tcout), lambda j, b: (0, 0, j)),
            pl.BlockSpec((1, tcout), lambda j, b: (0, j)),
            pl.BlockSpec((1, tcout), lambda j, b: (0, j)),
        ],
        out_specs=out_spec,
        scratch_shapes=scratch,
        compiler_params=pltpu.CompilerParams(
            dimension_semantics=("parallel", "parallel")),
        cost_estimate=pl.CostEstimate(
            flops=2 * n * hw * 9 * cin * cout,
            transcendentals=0,
            bytes_accessed=(2 * n * hw * cin * nblk + 2 * 9 * cin * cout
                            + 8 * cout + out_bytes * n * ho * wo * cout)),
    )(x, w9, scale, shift)
    if pool:
        y = y.reshape(n, ho * wo, cout)
    return y


def conv_transpose2x2_bn_act(x, w2, scale4, shift4, n, h, w, act,
                             out_dtype=jnp.bfloat16):
    """x: (n, h*w, cin) bf16 -> (n, (2h)*(2w), cout) out_dtype."""
    hw = h * w
    cin = x.shape[-1]
    m = n * hw
    x2 = x.reshape(m, cin)
    n4 = w2.shape[-1]                       # 4 * cout
    cout = n4 // 4
    if n4 % 1024 == 0:
        tn = 1024
    elif n4 % 512 == 0:
        tn = 512
    elif n4 % 256 == 0:
        tn = 256
    else:
        tn = n4
    nblk = n4 // tn
    kernel = functools.partial(_matmul_bn_act_kernel, act=act)
    y = pl.pallas_call(
        kernel,
        out_shape=jax.ShapeDtypeStruct((m, n4), out_dtype),
        grid=(nblk,),
        in_specs=[
            pl.BlockSpec((m, cin), lambda j: (0, 0)),
            pl.BlockSpec((cin, tn), lambda j: (0, j)),
            pl.BlockSpec((1, tn), lambda j: (0, j)),
            pl.BlockSpec((1, tn), lambda j: (0, j)),
        ],
        out_specs=pl.BlockSpec((m, tn), lambda j: (0, j)),
        compiler_params=pltpu.CompilerParams(
            dimension_semantics=("parallel",)),
        cost_estimate=pl.CostEstimate(
            flops=2 * m * cin * n4, transcendentals=0,
            bytes_accessed=2 * m * cin * nblk + 2 * cin * n4
            + jnp.dtype(out_dtype).itemsize * m * n4),
    )(x2, w2, scale4, shift4)
    # Interleave the 2x2 sub-pixel blocks: (m, 4*cout) -> (n, 2h*2w, cout).
    y = y.reshape(n, h, w, 2, 2, cout)
    y = jnp.transpose(y, (0, 1, 3, 2, 4, 5)).reshape(n, 2 * h * 2 * w, cout)
    return y


def maxpool2x2(x, n, h, w):
    """Standalone 2x2 max-pool for the tiny (w < 8) feature maps."""
    c = x.shape[-1]
    ho, wo = h // 2, w // 2
    x4 = x.reshape(n, h, w, c)
    out = pl.pallas_call(
        _maxpool2x2_kernel,
        out_shape=jax.ShapeDtypeStruct((n, ho, wo, c), x.dtype),
        grid=(n,),
        in_specs=[pl.BlockSpec((None, h, w, c), lambda b: (b, 0, 0, 0))],
        out_specs=pl.BlockSpec((None, ho, wo, c), lambda b: (b, 0, 0, 0)),
        scratch_shapes=[pltpu.VMEM((ho, w, c), jnp.float32)],
        compiler_params=pltpu.CompilerParams(
            dimension_semantics=("parallel",)),
    )(x4)
    return out.reshape(n, ho * wo, c)


# --------------------------------------------------------------------------- #
# Network definition (matches the PyTorch Sequential exactly)
# --------------------------------------------------------------------------- #
ENC = [
    ("conv", 3, 64, True, "relu"), ("conv", 64, 64, True, "relu"), ("pool",),
    ("conv", 64, 128, True, "relu"), ("conv", 128, 128, True, "relu"), ("pool",),
    ("conv", 128, 256, True, "relu"), ("conv", 256, 256, True, "relu"),
    ("conv", 256, 256, True, "relu"), ("conv", 256, 256, True, "relu"), ("pool",),
    ("conv", 256, 512, True, "relu"), ("conv", 512, 512, True, "relu"),
    ("conv", 512, 512, True, "relu"), ("conv", 512, 512, True, "relu"), ("pool",),
    ("conv", 512, 512, True, "relu"), ("conv", 512, 512, True, "relu"),
    ("conv", 512, 512, True, "relu"), ("conv", 512, 512, True, "relu"), ("pool",),
]

DEC = [
    ("convT", 512, 512, True, "relu"),
    ("conv", 512, 512, True, "relu"), ("conv", 512, 512, True, "relu"),
    ("conv", 512, 512, True, "relu"), ("conv", 512, 512, False, "none"),
    ("convT", 512, 512, True, "relu"),
    ("conv", 512, 512, True, "relu"), ("conv", 512, 512, True, "relu"),
    ("conv", 512, 512, True, "relu"), ("conv", 512, 256, False, "none"),
    ("convT", 256, 256, True, "relu"),
    ("conv", 256, 256, True, "relu"), ("conv", 256, 256, True, "relu"),
    ("conv", 256, 256, True, "relu"), ("conv", 256, 128, False, "none"),
    ("convT", 128, 128, True, "relu"),
    ("conv", 128, 128, True, "relu"), ("conv", 128, 64, False, "none"),
    ("convT", 64, 64, True, "relu"),
    ("conv", 64, 64, True, "relu"), ("conv", 64, 3, False, "sigmoid"),
]

LAYERS = ENC + DEC


def _fold_bn(bias, bn, cout):
    if bn is None:
        scale = jnp.ones((cout,), jnp.float32)
        shift = bias
    else:
        gamma, beta, mean, var = bn
        scale = gamma / jnp.sqrt(var + BN_EPS)
        shift = beta + (bias - mean) * scale
    return scale, shift


def init_params(seed=42):
    base = jax.random.PRNGKey(seed)
    params = []
    idx = 0
    for spec in LAYERS:
        if spec[0] == "pool":
            params.append(None)
            continue
        kind, cin, cout, has_bn, _ = spec
        k = jax.random.fold_in(base, idx)
        idx += 1
        if kind == "conv":
            w = jax.random.normal(k, (3, 3, cin, cout), jnp.float32) * (2.0 / (9 * cin)) ** 0.5
        else:
            # NOTE: convT weight layout here is (Cin, kh, kw, Cout); loading real
            # PyTorch weights (Cin, Cout, kh, kw) would require a permute.
            w = jax.random.normal(k, (cin, 2, 2, cout), jnp.float32) * (1.0 / cin) ** 0.5
        b = jnp.zeros((cout,), jnp.float32)
        if has_bn:
            bn = (jnp.ones((cout,), jnp.float32), jnp.zeros((cout,), jnp.float32),
                  jnp.zeros((cout,), jnp.float32), jnp.ones((cout,), jnp.float32))
        else:
            bn = None
        params.append((w, b, bn))
    return params


def fold_params(params):
    """Pre-fold BN into scale/shift and pre-cast weights to bf16 (done once)."""
    folded = []
    for spec, p in zip(LAYERS, params):
        if spec[0] == "pool":
            folded.append(None)
            continue
        kind, cin, cout, _, _ = spec
        w, b, bn = p
        scale, shift = _fold_bn(b, bn, cout)
        if kind == "conv":
            folded.append((w.reshape(9, cin, cout).astype(jnp.bfloat16),
                           scale.reshape(1, cout), shift.reshape(1, cout)))
        else:
            folded.append((w.reshape(cin, 4 * cout).astype(jnp.bfloat16),
                           jnp.tile(scale, 4).reshape(1, 4 * cout),
                           jnp.tile(shift, 4).reshape(1, 4 * cout)))
    return folded


def autoencoder_forward(x_nchw, folded):
    # PyTorch boundary: NCHW f32 in / NCHW f32 out; internal compute is bf16
    # flat NHWC, one (h*w, c) slab per image.
    n, _, h, w = x_nchw.shape
    x = jnp.transpose(x_nchw, (0, 2, 3, 1)).astype(jnp.bfloat16)
    x = x.reshape(n, h * w, x.shape[-1])
    i = 0
    n_layers = len(LAYERS)
    while i < n_layers:
        spec = LAYERS[i]
        if spec[0] == "pool":
            x = maxpool2x2(x, n, h, w)
            h //= 2
            w //= 2
            i += 1
            continue
        kind, _, _, _, act = spec
        p = folded[i]
        out_dtype = jnp.float32 if i == n_layers - 1 else jnp.bfloat16
        if kind == "conv":
            fuse = (i + 1 < n_layers and LAYERS[i + 1][0] == "pool"
                    and w % 8 == 0 and h % 2 == 0)
            x = conv3x3_bn_act(x, p[0], p[1], p[2], h, w, act,
                               pool=fuse, out_dtype=out_dtype)
            if fuse:
                h //= 2
                w //= 2
                i += 2
            else:
                i += 1
        else:
            x = conv_transpose2x2_bn_act(x, p[0], p[1], p[2], n, h, w, act,
                                         out_dtype=out_dtype)
            h *= 2
            w *= 2
            i += 1
    x = x.reshape(n, h, w, x.shape[-1]).astype(jnp.float32)
    return jnp.transpose(x, (0, 3, 1, 2))


# --------------------------------------------------------------------------- #
if __name__ == "__main__":
    key = jax.random.PRNGKey(0)
    k1, k2, k3, k4 = jax.random.split(key, 4)

    # --- per-kernel self-tests against pure-JAX references ------------------ #
    n0, h0, w0, ci0, co0 = 2, 8, 8, 16, 32
    xt = jax.random.normal(k1, (n0, h0, w0, ci0), jnp.float32)
    wt = jax.random.normal(k2, (3, 3, ci0, co0), jnp.float32) * 0.1
    sc = jax.random.normal(k3, (co0,), jnp.float32) * 0.1 + 1.0
    sh = jax.random.normal(k4, (co0,), jnp.float32) * 0.1

    xbf = xt.astype(jnp.bfloat16)
    wbf = wt.astype(jnp.bfloat16)
    ref = jax.lax.conv_general_dilated(
        xbf.astype(jnp.float32), wbf.astype(jnp.float32), (1, 1), "SAME",
        dimension_numbers=("NHWC", "HWIO", "NHWC"))
    ref = jnp.maximum(ref * sc.reshape(1, 1, 1, -1) + sh.reshape(1, 1, 1, -1), 0.0)

    got = conv3x3_bn_act(xbf.reshape(n0, h0 * w0, ci0),
                         wbf.reshape(9, ci0, co0),
                         sc.reshape(1, co0), sh.reshape(1, co0), h0, w0, "relu")
    got = got.astype(jnp.float32).reshape(n0, h0, w0, co0)
    assert float(jnp.max(jnp.abs(got - ref))) < 1e-1

    # fused conv + 2x2 maxpool
    gotp = conv3x3_bn_act(xbf.reshape(n0, h0 * w0, ci0),
                          wbf.reshape(9, ci0, co0),
                          sc.reshape(1, co0), sh.reshape(1, co0), h0, w0, "relu",
                          pool=True)
    gotp = gotp.astype(jnp.float32).reshape(n0, h0 // 2, w0 // 2, co0)
    refp = jnp.max(ref.reshape(n0, h0 // 2, 2, w0 // 2, 2, co0), axis=(2, 4))
    assert float(jnp.max(jnp.abs(gotp - refp))) < 1e-1

    # standalone small maxpool (4x4 -> 2x2)
    xp = jax.random.normal(k2, (n0, 4, 4, 8), jnp.float32).astype(jnp.bfloat16)
    pooled = maxpool2x2(xp.reshape(n0, 16, 8), n0, 4, 4)
    pooled = pooled.astype(jnp.float32).reshape(n0, 2, 2, 8)
    pref = jnp.max(xp.astype(jnp.float32).reshape(n0, 2, 2, 2, 2, 8), axis=(2, 4))
    assert float(jnp.max(jnp.abs(pooled - pref))) < 1e-6

    # conv-transpose 2x2 stride 2
    wtt = jax.random.normal(k2, (ci0, 2, 2, co0), jnp.float32) * 0.1
    wttb = wtt.astype(jnp.bfloat16)
    tgot = conv_transpose2x2_bn_act(
        xbf.reshape(n0, h0 * w0, ci0), wttb.reshape(ci0, 4 * co0),
        jnp.tile(sc, 4).reshape(1, 4 * co0), jnp.tile(sh, 4).reshape(1, 4 * co0),
        n0, h0, w0, "relu")
    tgot = tgot.astype(jnp.float32).reshape(n0, 2 * h0, 2 * w0, co0)
    tref = jnp.einsum("nijc,cklo->nikjlo", xbf.astype(jnp.float32),
                      wttb.astype(jnp.float32)).reshape(n0, 2 * h0, 2 * w0, co0)
    tref = jnp.maximum(tref * sc.reshape(1, 1, 1, -1) + sh.reshape(1, 1, 1, -1), 0.0)
    assert float(jnp.max(jnp.abs(tgot - tref))) < 1e-1

    # --- full autoencoder forward ------------------------------------------ #
    params = init_params(seed=42)
    folded = fold_params(params)
    x = jax.random.normal(jax.random.PRNGKey(0), (2, 3, 32, 32), jnp.float32)

    fwd = jax.jit(autoencoder_forward)
    y = jax.block_until_ready(fwd(x, folded))

    assert y.shape == (2, 3, 32, 32), y.shape
    assert y.dtype == jnp.float32
    assert bool(jnp.all(jnp.isfinite(y)))
    assert bool(jnp.all((y >= 0.0) & (y <= 1.0)))   # final sigmoid
    print("KERNEL_OK")
</pallas_src>

<mosaic_0001>
module attributes {stable_mosaic.version = 11 : i64} {
  func.func @_conv3x3_bn_act_kernel(%arg0: i32, %arg1: i32, %arg2: memref<1x64x16xbf16, #tpu.memory_space<vmem>>, %arg3: memref<9x16x32xbf16, #tpu.memory_space<vmem>>, %arg4: memref<1x32xf32, #tpu.memory_space<vmem>>, %arg5: memref<1x32xf32, #tpu.memory_space<vmem>>, %arg6: memref<1x64x32xbf16, #tpu.memory_space<vmem>>, %arg7: memref<96x16xbf16, #tpu.memory_space<vmem>>) attributes {dimension_semantics = [#tpu.dimension_semantics<parallel>, #tpu.dimension_semantics<parallel>], iteration_bounds = array<i64: 1, 2>, scalar_prefetch = 0 : i64, scratch_operands = 1 : i64, tpu.core_type = #tpu.core_type<tc>, window_params = [{transform_indices = @transform_0, window_bounds = array<i64: 1, 64, 16>}, {transform_indices = @transform_1, window_bounds = array<i64: 9, 16, 32>}, {transform_indices = @transform_2, window_bounds = array<i64: 1, 32>}, {transform_indices = @transform_3, window_bounds = array<i64: 1, 32>}, {transform_indices = @transform_4, window_bounds = array<i64: 1, 64, 32>}]} {
    %cst = arith.constant 0.000000e+00 : bf16
    %0 = vector.broadcast %cst : bf16 to vector<96x16xbf16>
    %c0 = arith.constant 0 : index
    %c0_0 = arith.constant 0 : index
    %1 = vector.load %arg7[%c0, %c0_0] : memref<96x16xbf16, #tpu.memory_space<vmem>>, vector<96x16xbf16>
    tpu.vector_store %arg7[%c0, %c0_0], %0 {strides = array<i32>} : memref<96x16xbf16, #tpu.memory_space<vmem>>, vector<96x16xbf16>,
    %c0_1 = arith.constant 0 : index
    %c0_2 = arith.constant 0 : index
    %c0_3 = arith.constant 0 : index
    %2 = vector.load %arg2[%c0_1, %c0_2, %c0_3] : memref<1x64x16xbf16, #tpu.memory_space<vmem>>, vector<1x64x16xbf16>
    %3 = vector.shape_cast %2 : vector<1x64x16xbf16> to vector<64x16xbf16>
    %c16 = arith.constant 16 : index
    %c0_4 = arith.constant 0 : index
    %4 = vector.load %arg7[%c16, %c0_4] : memref<96x16xbf16, #tpu.memory_space<vmem>>, vector<64x16xbf16>
    tpu.vector_store %arg7[%c16, %c0_4], %3 {strides = array<i32>} : memref<96x16xbf16, #tpu.memory_space<vmem>>, vector<64x16xbf16>,
    %5 = tpu.iota {dimensions = array<i32: 0>} : vector<64x1xi32>
    %c8_i32 = arith.constant 8 : i32
    %c0_i32 = arith.constant 0 : i32
    %6 = arith.cmpi eq, %c8_i32, %c0_i32 : i32
    %c1_i32 = arith.constant 1 : i32
    %7 = arith.select %6, %c1_i32, %c8_i32 : i32
    %8 = vector.broadcast %7 : i32 to vector<64x1xi32>
    %9 = arith.remsi %5, %8 : vector<64x1xi32>
    %c0_i32_5 = arith.constant 0 : i32
    %10 = vector.broadcast %c0_i32_5 : i32 to vector<64x1xi32>
    %11 = arith.cmpi ne, %9, %10 : vector<64x1xi32>
    %c0_i32_6 = arith.constant 0 : i32
    %12 = vector.broadcast %c0_i32_6 : i32 to vector<64x1xi32>
    %13 = arith.cmpi slt, %9, %12 : vector<64x1xi32>
    %c0_i32_7 = arith.constant 0 : i32
    %14 = arith.cmpi slt, %7, %c0_i32_7 : i32
    %15 = vector.broadcast %14 : i1 to vector<64x1xi1>
    %16 = vector.broadcast %15 : vector<64x1xi1> to vector<64x1xi1>
    %17 = arith.xori %13, %16 : vector<64x1xi1>
    %18 = arith.andi %17, %11 : vector<64x1xi1>
    %19 = vector.broadcast %7 : i32 to vector<64x1xi32>
    %20 = arith.addi %9, %19 : vector<64x1xi32>
    %21 = arith.select %18, %20, %9 : vector<64x1xi1>, vector<64x1xi32>
    %c0_i32_8 = arith.constant 0 : i32
    %22 = vector.broadcast %c0_i32_8 : i32 to vector<64x1xi32>
    %23 = arith.cmpi sgt, %21, %22 : vector<64x1xi32>
    %c7_i32 = arith.constant 7 : i32
    %24 = vector.broadcast %c7_i32 : i32 to vector<64x1xi32>
    %25 = arith.cmpi slt, %21, %24 : vector<64x1xi32>
    %cst_9 = arith.constant 0.000000e+00 : f32
    %26 = vector.broadcast %cst_9 : f32 to vector<64x32xf32>
    %c7 = arith.constant 7 : index
    %c0_10 = arith.constant 0 : index
    %27 = vector.load %arg7[%c7, %c0_10] : memref<96x16xbf16, #tpu.memory_space<vmem>>, vector<64x16xbf16>
    %c0_i32_11 = arith.constant 0 : i32
    %28 = arith.sitofp %c0_i32_11 : i32 to bf16
    %29 = vector.shape_cast %23 : vector<64x1xi1> to vector<64x1xi1>
    %30 = vector.broadcast %29 : vector<64x1xi1> to vector<64x16xi1>
    %31 = vector.broadcast %28 : bf16 to vector<64x16xbf16>
    %32 = arith.select %30, %27, %31 : vector<64x16xi1>, vector<64x16xbf16>
    %c0_12 = arith.constant 0 : index
    %c0_13 = arith.constant 0 : index
    %c0_14 = arith.constant 0 : index
    %33 = vector.load %arg3[%c0_12, %c0_13, %c0_14] : memref<9x16x32xbf16, #tpu.memory_space<vmem>>, vector<1x16x32xbf16>
    %34 = vector.shape_cast %33 : vector<1x16x32xbf16> to vector<16x32xbf16>
    %cst_15 = arith.constant dense<0.000000e+00> : vector<64x32xf32>
    %35 = tpu.matmul %32, %34, %cst_15 {dimension_numbers = #tpu.dot_dimension_numbers<[1], [0], [0], [1], [0, 0, 1, 1], [], []>} : vector<64x16xbf16>, vector<16x32xbf16>, vector<64x32xf32> -> vector<64x32xf32>
    %36 = arith.addf %26, %35 : vector<64x32xf32>
    %c8 = arith.constant 8 : index
    %c0_16 = arith.constant 0 : index
    %37 = vector.load %arg7[%c8, %c0_16] : memref<96x16xbf16, #tpu.memory_space<vmem>>, vector<64x16xbf16>
    %c1 = arith.constant 1 : index
    %c0_17 = arith.constant 0 : index
    %c0_18 = arith.constant 0 : index
    %38 = vector.load %arg3[%c1, %c0_17, %c0_18] : memref<9x16x32xbf16, #tpu.memory_space<vmem>>, vector<1x16x32xbf16>
    %39 = vector.shape_cast %38 : vector<1x16x32xbf16> to vector<16x32xbf16>
    %cst_19 = arith.constant dense<0.000000e+00> : vector<64x32xf32>
    %40 = tpu.matmul %37, %39, %cst_19 {dimension_numbers = #tpu.dot_dimension_numbers<[1], [0], [0], [1], [0, 0, 1, 1], [], []>} : vector<64x16xbf16>, vector<16x32xbf16>, vector<64x32xf32> -> vector<64x32xf32>
    %41 = arith.addf %36, %40 : vector<64x32xf32>
    %c9 = arith.constant 9 : index
    %c0_20 = arith.constant 0 : index
    %42 = vector.load %arg7[%c9, %c0_20] : memref<96x16xbf16, #tpu.memory_space<vmem>>, vector<64x16xbf16>
    %c0_i32_21 = arith.constant 0 : i32
    %43 = arith.sitofp %c0_i32_21 : i32 to bf16
    %44 = vector.shape_cast %25 : vector<64x1xi1> to vector<64x1xi1>
    %45 = vector.broadcast %44 : vector<64x1xi1> to vector<64x16xi1>
    %46 = vector.broadcast %43 : bf16 to vector<64x16xbf16>
    %47 = arith.select %45, %42, %46 : vector<64x16xi1>, vector<64x16xbf16>
    %c2 = arith.constant 2 : index
    %c0_22 = arith.constant 0 : index
    %c0_23 = arith.constant 0 : index
    %48 = vector.load %arg3[%c2, %c0_22, %c0_23] : memref<9x16x32xbf16, #tpu.memory_space<vmem>>, vector<1x16x32xbf16>
    %49 = vector.shape_cast %48 : vector<1x16x32xbf16> to vector<16x32xbf16>
    %cst_24 = arith.constant dense<0.000000e+00> : vector<64x32xf32>
    %50 = tpu.matmul %47, %49, %cst_24 {dimension_numbers = #tpu.dot_dimension_numbers<[1], [0], [0], [1], [0, 0, 1, 1], [], []>} : vector<64x16xbf16>, vector<16x32xbf16>, vector<64x32xf32> -> vector<64x32xf32>
    %51 = arith.addf %41, %50 : vector<64x32xf32>
    %c15 = arith.constant 15 : index
    %c0_25 = arith.constant 0 : index
    %52 = vector.load %arg7[%c15, %c0_25] : memref<96x16xbf16, #tpu.memory_space<vmem>>, vector<64x16xbf16>
    %c0_i32_26 = arith.constant 0 : i32
    %53 = arith.sitofp %c0_i32_26 : i32 to bf16
    %54 = vector.shape_cast %23 : vector<64x1xi1> to vector<64x1xi1>
    %55 = vector.broadcast %54 : vector<64x1xi1> to vector<64x16xi1>
    %56 = vector.broadcast %53 : bf16 to vector<64x16xbf16>
    %57 = arith.select %55, %52, %56 : vector<64x16xi1>, vector<64x16xbf16>
    %c3 = arith.constant 3 : index
    %c0_27 = arith.constant 0 : index
    %c0_28 = arith.constant 0 : index
    %58 = vector.load %arg3[%c3, %c0_27, %c0_28] : memref<9x16x32xbf16, #tpu.memory_space<vmem>>, vector<1x16x32xbf16>
    %59 = vector.shape_cast %58 : vector<1x16x32xbf16> to vector<16x32xbf16>
    %cst_29 = arith.constant dense<0.000000e+00> : vector<64x32xf32>
    %60 = tpu.matmul %57, %59, %cst_29 {dimension_numbers = #tpu.dot_dimension_numbers<[1], [0], [0], [1], [0, 0, 1, 1], [], []>} : vector<64x16xbf16>, vector<16x32xbf16>, vector<64x32xf32> -> vector<64x32xf32>
    %61 = arith.addf %51, %60 : vector<64x32xf32>
    %c16_30 = arith.constant 16 : index
    %c0_31 = arith.constant 0 : index
    %62 = vector.load %arg7[%c16_30, %c0_31] : memref<96x16xbf16, #tpu.memory_space<vmem>>, vector<64x16xbf16>
    %c4 = arith.constant 4 : index
    %c0_32 = arith.constant 0 : index
    %c0_33 = arith.constant 0 : index
    %63 = vector.load %arg3[%c4, %c0_32, %c0_33] : memref<9x16x32xbf16, #tpu.memory_space<vmem>>, vector<1x16x32xbf16>
    %64 = vector.shape_cast %63 : vector<1x16x32xbf16> to vector<16x32xbf16>
    %cst_34 = arith.constant dense<0.000000e+00> : vector<64x32xf32>
    %65 = tpu.matmul %62, %64, %cst_34 {dimension_numbers = #tpu.dot_dimension_numbers<[1], [0], [0], [1], [0, 0, 1, 1], [], []>} : vector<64x16xbf16>, vector<16x32xbf16>, vector<64x32xf32> -> vector<64x32xf32>
    %66 = arith.addf %61, %65 : vector<64x32xf32>
    %c17 = arith.constant 17 : index
    %c0_35 = arith.constant 0 : index
    %67 = vector.load %arg7[%c17, %c0_35] : memref<96x16xbf16, #tpu.memory_space<vmem>>, vector<64x16xbf16>
    %c0_i32_36 = arith.constant 0 : i32
    %68 = arith.sitofp %c0_i32_36 : i32 to bf16
    %69 = vector.shape_cast %25 : vector<64x1xi1> to vector<64x1xi1>
    %70 = vector.broadcast %69 : vector<64x1xi1> to vector<64x16xi1>
    %71 = vector.broadcast %68 : bf16 to vector<64x16xbf16>
    %72 = arith.select %70, %67, %71 : vector<64x16xi1>, vector<64x16xbf16>
    %c5 = arith.constant 5 : index
    %c0_37 = arith.constant 0 : index
    %c0_38 = arith.constant 0 : index
    %73 = vector.load %arg3[%c5, %c0_37, %c0_38] : memref<9x16x32xbf16, #tpu.memory_space<vmem>>, vector<1x16x32xbf16>
    %74 = vector.shape_cast %73 : vector<1x16x32xbf16> to vector<16x32xbf16>
    %cst_39 = arith.constant dense<0.000000e+00> : vector<64x32xf32>
    %75 = tpu.matmul %72, %74, %cst_39 {dimension_numbers = #tpu.dot_dimension_numbers<[1], [0], [0], [1], [0, 0, 1, 1], [], []>} : vector<64x16xbf16>, vector<16x32xbf16>, vector<64x32xf32> -> vector<64x32xf32>
    %76 = arith.addf %66, %75 : vector<64x32xf32>
    %c23 = arith.constant 23 : index
    %c0_40 = arith.constant 0 : index
    %77 = vector.load %arg7[%c23, %c0_40] : memref<96x16xbf16, #tpu.memory_space<vmem>>, vector<64x16xbf16>
    %c0_i32_41 = arith.constant 0 : i32
    %78 = arith.sitofp %c0_i32_41 : i32 to bf16
    %79 = vector.shape_cast %23 : vector<64x1xi1> to vector<64x1xi1>
    %80 = vector.broadcast %79 : vector<64x1xi1> to vector<64x16xi1>
    %81 = vector.broadcast %78 : bf16 to vector<64x16xbf16>
    %82 = arith.select %80, %77, %81 : vector<64x16xi1>, vector<64x16xbf16>
    %c6 = arith.constant 6 : index
    %c0_42 = arith.constant 0 : index
    %c0_43 = arith.constant 0 : index
    %83 = vector.load %arg3[%c6, %c0_42, %c0_43] : memref<9x16x32xbf16, #tpu.memory_space<vmem>>, vector<1x16x32xbf16>
    %84 = vector.shape_cast %83 : vector<1x16x32xbf16> to vector<16x32xbf16>
    %cst_44 = arith.constant dense<0.000000e+00> : vector<64x32xf32>
    %85 = tpu.matmul %82, %84, %cst_44 {dimension_numbers = #tpu.dot_dimension_numbers<[1], [0], [0], [1], [0, 0, 1, 1], [], []>} : vector<64x16xbf16>, vector<16x32xbf16>, vector<64x32xf32> -> vector<64x32xf32>
    %86 = arith.addf %76, %85 : vector<64x32xf32>
    %c24 = arith.constant 24 : index
    %c0_45 = arith.constant 0 : index
    %87 = vector.load %arg7[%c24, %c0_45] : memref<96x16xbf16, #tpu.memory_space<vmem>>, vector<64x16xbf16>
    %c7_46 = arith.constant 7 : index
    %c0_47 = arith.constant 0 : index
    %c0_48 = arith.constant 0 : index
    %88 = vector.load %arg3[%c7_46, %c0_47, %c0_48] : memref<9x16x32xbf16, #tpu.memory_space<vmem>>, vector<1x16x32xbf16>
    %89 = vector.shape_cast %88 : vector<1x16x32xbf16> to vector<16x32xbf16>
    %cst_49 = arith.constant dense<0.000000e+00> : vector<64x32xf32>
    %90 = tpu.matmul %87, %89, %cst_49 {dimension_numbers = #tpu.dot_dimension_numbers<[1], [0], [0], [1], [0, 0, 1, 1], [], []>} : vector<64x16xbf16>, vector<16x32xbf16>, vector<64x32xf32> -> vector<64x32xf32>
    %91 = arith.addf %86, %90 : vector<64x32xf32>
    %c25 = arith.constant 25 : index
    %c0_50 = arith.constant 0 : index
    %92 = vector.load %arg7[%c25, %c0_50] : memref<96x16xbf16, #tpu.memory_space<vmem>>, vector<64x16xbf16>
    %c0_i32_51 = arith.constant 0 : i32
    %93 = arith.sitofp %c0_i32_51 : i32 to bf16
    %94 = vector.shape_cast %25 : vector<64x1xi1> to vector<64x1xi1>
    %95 = vector.broadcast %94 : vector<64x1xi1> to vector<64x16xi1>
    %96 = vector.broadcast %93 : bf16 to vector<64x16xbf16>
    %97 = arith.select %95, %92, %96 : vector<64x16xi1>, vector<64x16xbf16>
    %c8_52 = arith.constant 8 : index
    %c0_53 = arith.constant 0 : index
    %c0_54 = arith.constant 0 : index
    %98 = vector.load %arg3[%c8_52, %c0_53, %c0_54] : memref<9x16x32xbf16, #tpu.memory_space<vmem>>, vector<1x16x32xbf16>
    %99 = vector.shape_cast %98 : vector<1x16x32xbf16> to vector<16x32xbf16>
    %cst_55 = arith.constant dense<0.000000e+00> : vector<64x32xf32>
    %100 = tpu.matmul %97, %99, %cst_55 {dimension_numbers = #tpu.dot_dimension_numbers<[1], [0], [0], [1], [0, 0, 1, 1], [], []>} : vector<64x16xbf16>, vector<16x32xbf16>, vector<64x32xf32> -> vector<64x32xf32>
    %101 = arith.addf %91, %100 : vector<64x32xf32>
    %c0_56 = arith.constant 0 : index
    %c0_57 = arith.constant 0 : index
    %102 = vector.load %arg4[%c0_56, %c0_57] : memref<1x32xf32, #tpu.memory_space<vmem>>, vector<1x32xf32>
    %103 = vector.broadcast %102 : vector<1x32xf32> to vector<64x32xf32>
    %104 = arith.mulf %101, %103 : vector<64x32xf32>
    %c0_58 = arith.constant 0 : index
    %c0_59 = arith.constant 0 : index
    %105 = vector.load %arg5[%c0_58, %c0_59] : memref<1x32xf32, #tpu.memory_space<vmem>>, vector<1x32xf32>
    %106 = vector.broadcast %105 : vector<1x32xf32> to vector<64x32xf32>
    %107 = arith.addf %104, %106 : vector<64x32xf32>
    %cst_60 = arith.constant 0.000000e+00 : f32
    %108 = vector.broadcast %cst_60 : f32 to vector<64x32xf32>
    %109 = arith.maximumf %107, %108 : vector<64x32xf32>
    %110 = arith.truncf %109 : vector<64x32xf32> to vector<64x32xbf16>
    %c0_61 = arith.constant 0 : index
    %c0_62 = arith.constant 0 : index
    %c0_63 = arith.constant 0 : index
    %111 = vector.load %arg6[%c0_61, %c0_62, %c0_63] : memref<1x64x32xbf16, #tpu.memory_space<vmem>>, vector<1x64x32xbf16>
    %112 = vector.shape_cast %111 : vector<1x64x32xbf16> to vector<64x32xbf16>
    %113 = vector.shape_cast %110 : vector<64x32xbf16> to vector<1x64x32xbf16>
    tpu.vector_store %arg6[%c0_61, %c0_62, %c0_63], %113 {strides = array<i32>} : memref<1x64x32xbf16, #tpu.memory_space<vmem>>, vector<1x64x32xbf16>,
    return
  }
  func.func @transform_0(%arg0: i32, %arg1: i32) -> (i32, i32, i32) {
    %c0_i32 = arith.constant 0 : i32
    %c0_i32_0 = arith.constant 0 : i32
    %c0_i32_1 = arith.constant 0 : i32
    return %arg1, %c0_i32, %c0_i32_0 : i32, i32, i32
  }
  func.func @transform_1(%arg0: i32, %arg1: i32) -> (i32, i32, i32) {
    %c0_i32 = arith.constant 0 : i32
    %c0_i32_0 = arith.constant 0 : i32
    %c0_i32_1 = arith.constant 0 : i32
    return %c0_i32, %c0_i32_0, %arg0 : i32, i32, i32
  }
  func.func @transform_2(%arg0: i32, %arg1: i32) -> (i32, i32) {
    %c0_i32 = arith.constant 0 : i32
    %c0_i32_0 = arith.constant 0 : i32
    return %c0_i32, %arg0 : i32, i32
  }
  func.func @transform_3(%arg0: i32, %arg1: i32) -> (i32, i32) {
    %c0_i32 = arith.constant 0 : i32
    %c0_i32_0 = arith.constant 0 : i32
    return %c0_i32, %arg0 : i32, i32
  }
  func.func @transform_4(%arg0: i32, %arg1: i32) -> (i32, i32, i32) {
    %c0_i32 = arith.constant 0 : i32
    %c0_i32_0 = arith.constant 0 : i32
    return %arg1, %c0_i32, %arg0 : i32, i32, i32
  }
}

</mosaic_0001>

<llo_original>
// kernel: tpu_custom_call.1
$region0: #{tpu_custom_call.1}
  #allocation0 [shape = 'u32[]', space=smem, size = 0x4, offset = 0x4, fixed_abs, tag = 'smem constant byte address 0x4 - core index']
  #allocation1 [shape = 'u32[72,128]{1,0:T(1,128)}', space=vmem, size = 0x9000, scoped, tag = 'internal scratch']
  #allocation2 [shape = 'bf16[96,16]{1,0:T(8,128)(2,1)}', space=vmem, size = 0x6000, scoped, tag = 'scratch operand']
  %s0 = inlined_call_operand.vmem [shape: bf16[2,64,16], index: 0, kind: input, shape index: {}]
  %s1 = inlined_call_operand.vmem [shape: bf16[9,16,32], index: 1, kind: input, shape index: {}]
  %s2 = inlined_call_operand.vmem [shape: f32[1,32], index: 2, kind: input, shape index: {}]
  %s3 = inlined_call_operand.vmem [shape: f32[1,32], index: 3, kind: input, shape index: {}]
  %s4 = inlined_call_operand.vmem [shape: bf16[2,64,32], index: 4, kind: output, shape index: {}]
  %s5 = sld [smem:[#allocation0]]
  $region49: #{tpu_custom_call.1} parent=0
    _
  %s7 = ssub.s32 1, %s5
  %s8 = scalar_select 0, %s7, %s5
  loop: start=0, step=1, limit=4
  $region2: #{tpu_custom_call.1} parent=0 // loop_pre_header
    _
  $region3: #{tpu_custom_call.1} parent=0 // loop_header
    %s10 = sphi 0, %s14
    %p11 = scmp.ge.s32.totalorder %s10, 4
    %s17 = sphi 0, %s29
    %s18 = sphi 0, %s25
    %s19 = sphi 0, %s17
    %s20 = sphi 0, %s18
    %s21 = sphi 0, %s19
    %s22 = sphi 0, %s20
    %s32 = sphi 0, %s34
    %s35 = sphi 0, %s32
    %s36 = sphi 0, %s35
    %s52 = sphi 0, %s36
    %s58 = sphi 0, %s60
    %s61 = sphi 0, %s58
    %s62 = sphi 0, %s61
    %s78 = sphi 0, %s62
    %s84 = sphi 0, %s86
    %s87 = sphi 0, %s84
    %s88 = sphi 0, %s87
    %s104 = sphi 0, %s88
    %s110 = sphi 0, %s112
    %s113 = sphi 0, %s110
    %s114 = sphi 0, %s113
    %s130 = sphi 0, %s114
    %s138 = sphi 0, %s140
    %s141 = sphi 0, %s138
    %s142 = sphi 0, %s141
    %s158 = sphi 0, %s142
  $region4: #{tpu_custom_call.1} parent=0 // loop_header_branch
    %13 = sbr.rel (%p11) target = $region8
  $region5: #{tpu_custom_call.1} parent=0 // loop_body
    %s15 = ssub.s32 %s10, 1
    %s16 = ssub.s32 %s10, 2
    %s23 = sadd.s32 1, %s18
    %p24 = scmp.ge.s32.totalorder %s23, 2
    %s25 = scalar_select %p24, 0, %s23
    %s26 = sadd.s32 1, %s17
    %s27 = scalar_select %p24, %s26, %s17
    %p28 = scmp.ge.s32.totalorder %s27, 1
    %s29 = scalar_select %p28, 0, %s27
    %s30 = ssub.s32 %s18, %s25
    %p31 = scmp.eq.s32.totalorder %s30, 0
    %s33 = sadd.s32 %s32, 1
    %s34 = scalar_select %p31, %s32, %s33
    %p37 = pneg %p31
    %p38 = scmp.eq.s32.totalorder %s10, 1
    %p39 = por %p37, %p38
    %p40 = scmp.ne.s32.totalorder %s32, %s35
    %p41 = scmp.eq.s32.totalorder %s10, 0
    %p42 = por %p40, %p41
    %p43 = scmp.ne.s32.totalorder %s32, %s35
    %p44 = scmp.eq.s32.totalorder %s15, 1
    %p45 = por %p43, %p44
    %p46 = scmp.ne.s32.totalorder %s35, %s36
    %p47 = scmp.eq.s32.totalorder %s15, 0
    %p48 = por %p46, %p47
    %p49 = scmp.ne.s32.totalorder %s35, %s36
    %p50 = scmp.eq.s32.totalorder %s16, 1
    %p51 = por %p49, %p50
    %p53 = scmp.ne.s32.totalorder %s36, %s52
    %p54 = scmp.eq.s32.totalorder %s16, 0
    %p55 = por %p53, %p54
    %s56 = ssub.s32 %s17, %s29
    %p57 = scmp.eq.s32.totalorder %s56, 0
    %s59 = sadd.s32 %s58, 1
    %s60 = scalar_select %p57, %s58, %s59
    %p63 = pneg %p57
    %p64 = scmp.eq.s32.totalorder %s10, 1
    %p65 = por %p63, %p64
    %p66 = scmp.ne.s32.totalorder %s58, %s61
    %p67 = scmp.eq.s32.totalorder %s10, 0
    %p68 = por %p66, %p67
    %p69 = scmp.ne.s32.totalorder %s58, %s61
    %p70 = scmp.eq.s32.totalorder %s15, 1
    %p71 = por %p69, %p70
    %p72 = scmp.ne.s32.totalorder %s61, %s62
    %p73 = scmp.eq.s32.totalorder %s15, 0
    %p74 = por %p72, %p73
    %p75 = scmp.ne.s32.totalorder %s61, %s62
    %p76 = scmp.eq.s32.totalorder %s16, 1
    %p77 = por %p75, %p76
    %p79 = scmp.ne.s32.totalorder %s62, %s78
    %p80 = scmp.eq.s32.totalorder %s16, 0
    %p81 = por %p79, %p80
    %s82 = ssub.s32 %s17, %s29
    %p83 = scmp.eq.s32.totalorder %s82, 0
    %s85 = sadd.s32 %s84, 1
    %s86 = scalar_select %p83, %s84, %s85
    %p89 = pneg %p83
    %p90 = scmp.eq.s32.totalorder %s10, 1
    %p91 = por %p89, %p90
    %p92 = scmp.ne.s32.totalorder %s84, %s87
    %p93 = scmp.eq.s32.totalorder %s10, 0
    %p94 = por %p92, %p93
    %p95 = scmp.ne.s32.totalorder %s84, %s87
    %p96 = scmp.eq.s32.totalorder %s15, 1
    %p97 = por %p95, %p96
    %p98 = scmp.ne.s32.totalorder %s87, %s88
    %p99 = scmp.eq.s32.totalorder %s15, 0
    %p100 = por %p98, %p99
    %p101 = scmp.ne.s32.totalorder %s87, %s88
    %p102 = scmp.eq.s32.totalorder %s16, 1
    %p103 = por %p101, %p102
    %p105 = scmp.ne.s32.totalorder %s88, %s104
    %p106 = scmp.eq.s32.totalorder %s16, 0
    %p107 = por %p105, %p106
    %s108 = ssub.s32 %s17, %s29
    %p109 = scmp.eq.s32.totalorder %s108, 0
    %s111 = sadd.s32 %s110, 1
    %s112 = scalar_select %p109, %s110, %s111
    %p115 = pneg %p109
    %p116 = scmp.eq.s32.totalorder %s10, 1
    %p117 = por %p115, %p116
    %p118 = scmp.ne.s32.totalorder %s110, %s113
    %p119 = scmp.eq.s32.totalorder %s10, 0
    %p120 = por %p118, %p119
    %p121 = scmp.ne.s32.totalorder %s110, %s113
    %p122 = scmp.eq.s32.totalorder %s15, 1
    %p123 = por %p121, %p122
    %p124 = scmp.ne.s32.totalorder %s113, %s114
    %p125 = scmp.eq.s32.totalorder %s15, 0
    %p126 = por %p124, %p125
    %p127 = scmp.ne.s32.totalorder %s113, %s114
    %p128 = scmp.eq.s32.totalorder %s16, 1
    %p129 = por %p127, %p128
    %p131 = scmp.ne.s32.totalorder %s114, %s130
    %p132 = scmp.eq.s32.totalorder %s16, 0
    %p133 = por %p131, %p132
    %s134 = ssub.s32 %s18, %s25
    %s135 = ssub.s32 %s17, %s29
    %s136 = sor.u32 %s134, %s135
    %p137 = scmp.eq.s32.totalorder %s136, 0
    %s139 = sadd.s32 %s138, 1
    %s140 = scalar_select %p137, %s138, %s139
    %p143 = pneg %p137
    %p144 = scmp.eq.s32.totalorder %s10, 1
    %p145 = por %p143, %p144
    %p146 = scmp.ne.s32.totalorder %s138, %s141
    %p147 = scmp.eq.s32.totalorder %s10, 0
    %p148 = por %p146, %p147
    %p149 = scmp.ne.s32.totalorder %s138, %s141
    %p150 = scmp.eq.s32.totalorder %s15, 1
    %p151 = por %p149, %p150
    %p152 = scmp.ne.s32.totalorder %s141, %s142
    %p153 = scmp.eq.s32.totalorder %s15, 0
    %p154 = por %p152, %p153
    %p155 = scmp.ne.s32.totalorder %s141, %s142
    %p156 = scmp.eq.s32.totalorder %s16, 1
    %p157 = por %p155, %p156
    %p159 = scmp.ne.s32.totalorder %s142, %s158
    %p160 = scmp.eq.s32.totalorder %s16, 0
    %p161 = por %p159, %p160
    %p162 = scmp.le.s32.totalorder 1, %s10
    %p163 = scmp.lt.s32.totalorder %s10, 3
    %p164 = pnand %p162, %p163
    %p165 = pneg %p164
    // Predicated region
    $region9: #{tpu_custom_call.1} parent=5 // pred_check
      _
    $region10: #{tpu_custom_call.1} parent=5 // pred_check_branch
      %167 = sbr.rel (%p164) target = $region12
    $region11: #{tpu_custom_call.1} parent=5 // pred_region
      %s168 = ssub.s32 %s10, 1
      // Predicated region
      $region13: #{tpu_custom_call.1} parent=11 // pred_check
        %p169 = pneg %p74
      $region14: #{tpu_custom_call.1} parent=11 // pred_check_branch
        %171 = sbr.rel (%p169) target = $region16
      $region15: #{tpu_custom_call.1} parent=11 // pred_region
        %p172 = scmp.lt.s32.totalorder %s19, 0
        %s173 = scalar_select %p172, %s19, 0
        %s174 = smul.addr %s173, 4
        %s175 = scalar_lea.vmem %s1, %s174
      $region16: #{tpu_custom_call.1} parent=11 // pred_fallthru
        _
      // Predicated region
      $region17: #{tpu_custom_call.1} parent=11 // pred_check
        %p176 = pneg %p100
      $region18: #{tpu_custom_call.1} parent=11 // pred_check_branch
        %178 = sbr.rel (%p176) target = $region20
      $region19: #{tpu_custom_call.1} parent=11 // pred_region
        %p179 = scmp.lt.s32.totalorder %s19, 0
        %s180 = scalar_select %p179, %s19, 0
        %s181 = scalar_lea.vmem %s2, %s180
      $region20: #{tpu_custom_call.1} parent=11 // pred_fallthru
        _
      // Predicated region
      $region21: #{tpu_custom_call.1} parent=11 // pred_check
        %p182 = pneg %p126
      $region22: #{tpu_custom_call.1} parent=11 // pred_check_branch
        %184 = sbr.rel (%p182) target = $region24
      $region23: #{tpu_custom_call.1} parent=11 // pred_region
        %p185 = scmp.lt.s32.totalorder %s19, 0
        %s186 = scalar_select %p185, %s19, 0
        %s187 = scalar_lea.vmem %s3, %s186
      $region24: #{tpu_custom_call.1} parent=11 // pred_fallthru
        _
    $region12: #{tpu_custom_call.1} parent=5 // pred_fallthru
      _
    %p188 = scmp.lt.s32.totalorder %s10, 2
    // Predicated region
    $region25: #{tpu_custom_call.1} parent=5 // pred_check
      %p189 = pneg %p188
    $region26: #{tpu_custom_call.1} parent=5 // pred_check_branch
      %191 = sbr.rel (%p189) target = $region28
    $region27: #{tpu_custom_call.1} parent=5 // pred_region
      // Predicated region
      $region29: #{tpu_custom_call.1} parent=27 // pred_check
        %p192 = pneg %p42
      $region30: #{tpu_custom_call.1} parent=27 // pred_check_branch
        %194 = sbr.rel (%p192) target = $region32
      $region31: #{tpu_custom_call.1} parent=27 // pred_region
        %p195 = scmp.lt.s32.totalorder %s18, 1
        %s196 = scalar_select %p195, %s18, 1
        %s197 = smul.addr %s196, 8
        %s198 = smul.addr %s197, 4
        %s199 = scalar_lea.vmem %s0, %s198
      $region32: #{tpu_custom_call.1} parent=27 // pred_fallthru
        _
    $region28: #{tpu_custom_call.1} parent=5 // pred_fallthru
      _
    %p200 = scmp.le.s32.totalorder 1, %s10
    %p201 = scmp.lt.s32.totalorder %s10, 3
    %p202 = pnand %p200, %p201
    %p203 = pneg %p202
    // Predicated region
    $region33: #{tpu_custom_call.1} parent=5 // pred_check
      _
    $region34: #{tpu_custom_call.1} parent=5 // pred_check_branch
      %205 = sbr.rel (%p202) target = $region36
    $region35: #{tpu_custom_call.1} parent=5 // pred_region
      %s206 = ssub.s32 %s10, 1
      %p207 = scmp.lt.s32.totalorder %s20, 1
      %s208 = scalar_select %p207, %s20, 1
      %s209 = smul.addr %s208, 8
      %s210 = smul.addr %s209, 4
      %s211 = scalar_lea.vmem %s0, %s210
      %p212 = pneg %p48
      %p213 = pneg %p45
      %p214 = scmp.lt.s32.totalorder %s19, 0
      %s215 = scalar_select %p214, %s19, 0
      %s216 = smul.addr %s215, 4
      %s217 = scalar_lea.vmem %s1, %s216
      %p218 = pneg %p74
      %p219 = pneg %p71
      %p220 = scmp.lt.s32.totalorder %s19, 0
      %s221 = scalar_select %p220, %s19, 0
      %s222 = scalar_lea.vmem %s2, %s221
      %p223 = pneg %p100
      %p224 = pneg %p97
      %p225 = scmp.lt.s32.totalorder %s19, 0
      %s226 = scalar_select %p225, %s19, 0
      %s227 = scalar_lea.vmem %s3, %s226
      %p228 = pneg %p126
      %p229 = pneg %p123
      %p230 = pneg %p154
      %p231 = pneg %p151
      %p232 = scmp.lt.s32.totalorder %s20, 1
      %s233 = scalar_select %p232, %s20, 1
      %p234 = scmp.lt.s32.totalorder %s19, 0
      %s235 = scalar_select %p234, %s19, 0
      %s236 = smul.addr %s233, 8
      %s237 = sadd.s32 %s235, %s236
      %s238 = smul.addr %s237, 4
      %s239 = scalar_lea.vmem %s4, %s238
      %p240 = scmp.lt.s32.totalorder %s20, 1
      %s241 = scalar_select %p240, %s20, 1
      %s242 = smul.addr %s241, 8
      %s243 = smul.addr %s242, 4
      %s244 = scalar_lea.vmem %s0, %s243
      %p245 = scmp.lt.s32.totalorder %s19, 0
      %s246 = scalar_select %p245, %s19, 0
      %s247 = smul.addr %s246, 4
      %s248 = scalar_lea.vmem %s1, %s247
      %p249 = scmp.lt.s32.totalorder %s19, 0
      %s250 = scalar_select %p249, %s19, 0
      %s251 = scalar_lea.vmem %s2, %s250
      %p252 = scmp.lt.s32.totalorder %s19, 0
      %s253 = scalar_select %p252, %s19, 0
      %s254 = scalar_lea.vmem %s3, %s253
      %p255 = scmp.lt.s32.totalorder %s20, 1
      %s256 = scalar_select %p255, %s20, 1
      %p257 = scmp.lt.s32.totalorder %s19, 0
      %s258 = scalar_select %p257, %s19, 0
      %s259 = smul.addr %s256, 8
      %s260 = sadd.s32 %s258, %s259
      %s261 = smul.addr %s260, 4
      %s262 = scalar_lea.vmem %s4, %s261
      %vm266 = vcmask 125952
      %267 = vst.msk [vmem:[#allocation2] sm:$0xf] %vm266, 0
      %268 = vst.msk [vmem:[#allocation2 + $0x4] sm:$0xf] %vm266, 0
      %269 = vst.msk [vmem:[#allocation2 + $0x8] sm:$0xf] %vm266, 0
      %270 = vst.msk [vmem:[#allocation2 + $0xc] sm:$0xf] %vm266, 0
      %271 = vst.msk [vmem:[#allocation2 + $0x10] sm:$0xf] %vm266, 0
      %272 = vst.msk [vmem:[#allocation2 + $0x14] sm:$0xf] %vm266, 0
      %273 = vst.msk [vmem:[#allocation2 + $0x18] sm:$0xf] %vm266, 0
      %274 = vst.msk [vmem:[#allocation2 + $0x1c] sm:$0xf] %vm266, 0
      %275 = vst.msk [vmem:[#allocation2 + $0x20] sm:$0xf] %vm266, 0
      %276 = vst.msk [vmem:[#allocation2 + $0x24] sm:$0xf] %vm266, 0
      %277 = vst.msk [vmem:[#allocation2 + $0x28] sm:$0xf] %vm266, 0
      %278 = vst.msk [vmem:[#allocation2 + $0x2c] sm:$0xf] %vm266, 0
      %v279 = vld [vmem:[%s244] sm:$0xf]
      %v280 = vld [vmem:[%s244 + $0x4] sm:$0xf]
      %v281 = vld [vmem:[%s244 + $0x8] sm:$0xf]
      %v282 = vld [vmem:[%s244 + $0xc] sm:$0xf]
      %v283 = vld [vmem:[%s244 + $0x10] sm:$0xf]
      %v284 = vld [vmem:[%s244 + $0x14] sm:$0xf]
      %v285 = vld [vmem:[%s244 + $0x18] sm:$0xf]
      %v286 = vld [vmem:[%s244 + $0x1c] sm:$0xf]
      %287 = vst.msk [vmem:[#allocation2 + $0x8] sm:$0xf] %vm266, %v279
      %288 = vst.msk [vmem:[#allocation2 + $0xc] sm:$0xf] %vm266, %v280
      %289 = vst.msk [vmem:[#allocation2 + $0x10] sm:$0xf] %vm266, %v281
      %290 = vst.msk [vmem:[#allocation2 + $0x14] sm:$0xf] %vm266, %v282
      %291 = vst.msk [vmem:[#allocation2 + $0x18] sm:$0xf] %vm266, %v283
      %292 = vst.msk [vmem:[#allocation2 + $0x1c] sm:$0xf] %vm266, %v284
      %293 = vst.msk [vmem:[#allocation2 + $0x20] sm:$0xf] %vm266, %v285
      %294 = vst.msk [vmem:[#allocation2 + $0x24] sm:$0xf] %vm266, %v286
      %v295 = vlaneseq
      %v296 = vshrl.u32 %v295, 7
      %v297 = vadd.s32 %v296, 8
      %v298 = vadd.s32 %v296, 16
      %v299 = vadd.s32 %v296, 24
      %v300 = vadd.s32 %v296, 32
      %v301 = vadd.s32 %v296, 40
      %v302 = vadd.s32 %v296, 48
      %v303 = vadd.s32 %v296, 56
      %vm304 = vcmp.lt.s32.totalorder %v296, 0
      %v305 = vsub.s32 0, %v296
      %v306 = vsel %vm304, %v305, %v296
      %v307 = vshrl.u32 %v306, 3
      %v308 = vand.u32 %v306, 7
      %v309 = vsub.s32 0, %v308
      %v310 = vsel %vm304, %v309, %v308
      %vm311 = vcmp.lt.s32.totalorder %v297, 0
      %v312 = vsub.s32 0, %v297
      %v313 = vsel %vm311, %v312, %v297
      %v314 = vshrl.u32 %v313, 3
      %v315 = vand.u32 %v313, 7
      %v316 = vsub.s32 0, %v315
      %v317 = vsel %vm311, %v316, %v315
      %vm318 = vcmp.lt.s32.totalorder %v298, 0
      %v319 = vsub.s32 0, %v298
      %v320 = vsel %vm318, %v319, %v298
      %v321 = vshrl.u32 %v320, 3
      %v322 = vand.u32 %v320, 7
      %v323 = vsub.s32 0, %v322
      %v324 = vsel %vm318, %v323, %v322
      %vm325 = vcmp.lt.s32.totalorder %v299, 0
      %v326 = vsub.s32 0, %v299
      %v327 = vsel %vm325, %v326, %v299
      %v328 = vshrl.u32 %v327, 3
      %v329 = vand.u32 %v327, 7
      %v330 = vsub.s32 0, %v329
      %v331 = vsel %vm325, %v330, %v329
      %vm332 = vcmp.lt.s32.totalorder %v300, 0
      %v333 = vsub.s32 0, %v300
      %v334 = vsel %vm332, %v333, %v300
      %v335 = vshrl.u32 %v334, 3
      %v336 = vand.u32 %v334, 7
      %v337 = vsub.s32 0, %v336
      %v338 = vsel %vm332, %v337, %v336
      %vm339 = vcmp.lt.s32.totalorder %v301, 0
      %v340 = vsub.s32 0, %v301
      %v341 = vsel %vm339, %v340, %v301
      %v342 = vshrl.u32 %v341, 3
      %v343 = vand.u32 %v341, 7
      %v344 = vsub.s32 0, %v343
      %v345 = vsel %vm339, %v344, %v343
      %vm346 = vcmp.lt.s32.totalorder %v302, 0
      %v347 = vsub.s32 0, %v302
      %v348 = vsel %vm346, %v347, %v302
      %v349 = vshrl.u32 %v348, 3
      %v350 = vand.u32 %v348, 7
      %v351 = vsub.s32 0, %v350
      %v352 = vsel %vm346, %v351, %v350
      %vm353 = vcmp.lt.s32.totalorder %v303, 0
      %v354 = vsub.s32 0, %v303
      %v355 = vsel %vm353, %v354, %v303
      %v356 = vshrl.u32 %v355, 3
      %v357 = vand.u32 %v355, 7
      %v358 = vsub.s32 0, %v357
      %v359 = vsel %vm353, %v358, %v357
      %vm360 = vcmp.ne.s32.totalorder %v310, 0
      %vm361 = vcmp.ne.s32.totalorder %v317, 0
      %vm362 = vcmp.ne.s32.totalorder %v324, 0
      %vm363 = vcmp.ne.s32.totalorder %v331, 0
      %vm364 = vcmp.ne.s32.totalorder %v338, 0
      %vm365 = vcmp.ne.s32.totalorder %v345, 0
      %vm366 = vcmp.ne.s32.totalorder %v352, 0
      %vm367 = vcmp.ne.s32.totalorder %v359, 0
      %vm368 = vcmp.lt.s32.totalorder %v310, 0
      %vm369 = vcmp.lt.s32.totalorder %v317, 0
      %vm370 = vcmp.lt.s32.totalorder %v324, 0
      %vm371 = vcmp.lt.s32.totalorder %v331, 0
      %vm372 = vcmp.lt.s32.totalorder %v338, 0
      %vm373 = vcmp.lt.s32.totalorder %v345, 0
      %vm374 = vcmp.lt.s32.totalorder %v352, 0
      %vm375 = vcmp.lt.s32.totalorder %v359, 0
      %vm376 = vmand %vm368, %vm360
      %vm377 = vmand %vm369, %vm361
      %vm378 = vmand %vm370, %vm362
      %vm379 = vmand %vm371, %vm363
      %vm380 = vmand %vm372, %vm364
      %vm381 = vmand %vm373, %vm365
      %vm382 = vmand %vm374, %vm366
      %vm383 = vmand %vm375, %vm367
      %v384 = vadd.s32 %v310, 8
      %v385 = vadd.s32 %v317, 8
      %v386 = vadd.s32 %v324, 8
      %v387 = vadd.s32 %v331, 8
      %v388 = vadd.s32 %v338, 8
      %v389 = vadd.s32 %v345, 8
      %v390 = vadd.s32 %v352, 8
      %v391 = vadd.s32 %v359, 8
      %v392 = vsel %vm376, %v384, %v310
      %v393 = vsel %vm377, %v385, %v317
      %v394 = vsel %vm378, %v386, %v324
      %v395 = vsel %vm379, %v387, %v331
      %v396 = vsel %vm380, %v388, %v338
      %v397 = vsel %vm381, %v389, %v345
      %v398 = vsel %vm382, %v390, %v352
      %v399 = vsel %vm383, %v391, %v359
      %vm400 = vcmp.gt.s32.totalorder %v392, 0
      %vm401 = vcmp.gt.s32.totalorder %v393, 0
      %vm402 = vcmp.gt.s32.totalorder %v394, 0
      %vm403 = vcmp.gt.s32.totalorder %v395, 0
      %vm404 = vcmp.gt.s32.totalorder %v396, 0
      %vm405 = vcmp.gt.s32.totalorder %v397, 0
      %vm406 = vcmp.gt.s32.totalorder %v398, 0
      %vm407 = vcmp.gt.s32.totalorder %v399, 0
      %vm408 = vcmp.lt.s32.totalorder %v392, 7
      %vm409 = vcmp.lt.s32.totalorder %v393, 7
      %vm410 = vcmp.lt.s32.totalorder %v394, 7
      %vm411 = vcmp.lt.s32.totalorder %v395, 7
      %vm412 = vcmp.lt.s32.totalorder %v396, 7
      %vm413 = vcmp.lt.s32.totalorder %v397, 7
      %vm414 = vcmp.lt.s32.totalorder %v398, 7
      %vm415 = vcmp.lt.s32.totalorder %v399, 7
      %v416 = vld [vmem:[#allocation2] sm:$0x8]
      %v417 = vld [vmem:[#allocation2 + $0x4] sm:$0xf]
      %v418 = vld [vmem:[#allocation2 + $0x8] sm:$0xf]
      %v419 = vld [vmem:[#allocation2 + $0xc] sm:$0xf]
      %v420 = vld [vmem:[#allocation2 + $0x10] sm:$0xf]
      %v421 = vld [vmem:[#allocation2 + $0x14] sm:$0xf]
      %v422 = vld [vmem:[#allocation2 + $0x18] sm:$0xf]
      %v423 = vld [vmem:[#allocation2 + $0x1c] sm:$0xf]
      %v424 = vld [vmem:[#allocation2 + $0x20] sm:$0xf]
      %v425 = vsel %vm400, 1, 0
      %v426 = vsel %vm401, 1, 0
      %v427 = vsel %vm402, 1, 0
      %v428 = vsel %vm403, 1, 0
      %v429 = vsel %vm404, 1, 0
      %v430 = vsel %vm405, 1, 0
      %v431 = vsel %vm406, 1, 0
      %v432 = vsel %vm407, 1, 0
      %vm433 = vcmp.eq.s32.totalorder %v425, 1
      %vm434 = vcmp.eq.s32.totalorder %v426, 1
      %vm435 = vcmp.eq.s32.totalorder %v427, 1
      %vm436 = vcmp.eq.s32.totalorder %v428, 1
      %vm437 = vcmp.eq.s32.totalorder %v429, 1
      %vm438 = vcmp.eq.s32.totalorder %v430, 1
      %vm439 = vcmp.eq.s32.totalorder %v431, 1
      %vm440 = vcmp.eq.s32.totalorder %v432, 1
      %vm441 = vmpackc.low %vm433, %vm433
      %vm442 = vmpackc.low %vm434, %vm434
      %vm443 = vmpackc.low %vm435, %vm435
      %vm444 = vmpackc.low %vm436, %vm436
      %vm445 = vmpackc.low %vm437, %vm437
      %vm446 = vmpackc.low %vm438, %vm438
      %vm447 = vmpackc.low %vm439, %vm439
      %vm448 = vmpackc.low %vm440, %vm440
      %v449 = vsel %vm441, 65537, 0
      %v450 = vsel %vm442, 65537, 0
      %v451 = vsel %vm443, 65537, 0
      %v452 = vsel %vm444, 65537, 0
      %v453 = vsel %vm445, 65537, 0
      %v454 = vsel %vm446, 65537, 0
      %v455 = vsel %vm447, 65537, 0
      %v456 = vsel %vm448, 65537, 0
      %vm457 = vsmask.f32 3328
      %vm458 = vsmask.f32 7440
      %vm459 = vmor %vm457, %vm458
      %v461 = vshll.u32 %v449, 16
      %v463 = vrot.slane %v461, 5
      %v464 = vshrl.u32 %v449, 16
      %v466 = vrot.slane %v464, 4
      %v467 = vor.u32 %v466, %v463
      %v468 = vrot.slane %v467, 4
      %v470 = vshll.u32 %v450, 16
      %v472 = vrot.slane %v470, 5
      %v473 = vsel %vm459, %v468, %v472
      %v474 = vshrl.u32 %v450, 16
      %v476 = vrot.slane %v474, 4
      %v477 = vor.u32 %v476, %v472
      %v478 = vrot.slane %v477, 4
      %v480 = vshll.u32 %v451, 16
      %v482 = vrot.slane %v480, 5
      %v483 = vsel %vm459, %v478, %v482
      %v484 = vshrl.u32 %v451, 16
      %v486 = vrot.slane %v484, 4
      %v487 = vor.u32 %v486, %v482
      %v488 = vrot.slane %v487, 4
      %v490 = vshll.u32 %v452, 16
      %v492 = vrot.slane %v490, 5
      %v493 = vsel %vm459, %v488, %v492
      %v494 = vshrl.u32 %v452, 16
      %v496 = vrot.slane %v494, 4
      %v497 = vor.u32 %v496, %v492
      %v498 = vrot.slane %v497, 4
      %v500 = vshll.u32 %v453, 16
      %v502 = vrot.slane %v500, 5
      %v503 = vsel %vm459, %v498, %v502
      %v504 = vshrl.u32 %v453, 16
      %v506 = vrot.slane %v504, 4
      %v507 = vor.u32 %v506, %v502
      %v508 = vrot.slane %v507, 4
      %v510 = vshll.u32 %v454, 16
      %v512 = vrot.slane %v510, 5
      %v513 = vsel %vm459, %v508, %v512
      %v514 = vshrl.u32 %v454, 16
      %v516 = vrot.slane %v514, 4
      %v517 = vor.u32 %v516, %v512
      %v518 = vrot.slane %v517, 4
      %v520 = vshll.u32 %v455, 16
      %v522 = vrot.slane %v520, 5
      %v523 = vsel %vm459, %v518, %v522
      %v524 = vshrl.u32 %v455, 16
      %v526 = vrot.slane %v524, 4
      %v527 = vor.u32 %v526, %v522
      %v528 = vrot.slane %v527, 4
      %v530 = vshll.u32 %v456, 16
      %v532 = vrot.slane %v530, 5
      %v533 = vsel %vm459, %v528, %v532
      %v534 = vshrl.u32 %v456, 16
      %v536 = vrot.slane %v534, 4
      %v537 = vor.u32 %v536, %v532
      %v538 = vrot.slane %v537, 4
      %v539 = vunpack.c.l.b16 %v463
      %v540 = vunpack.c.h.b16 %v463
      %v541 = vunpack.c.l.b16 0
      %v542 = vunpack.c.h.b16 0
      %vm543 = vcmp.ne.s32.totalorder %v539, %v541
      %vm544 = vcmp.ne.s32.totalorder %v540, %v542
      %vm545 = vmpackc.low %vm544, %vm543
      %v546 = vunpack.c.l.b16 %v473
      %v547 = vunpack.c.h.b16 %v473
      %v548 = vunpack.c.l.b16 0
      %v549 = vunpack.c.h.b16 0
      %vm550 = vcmp.ne.s32.totalorder %v546, %v548
      %vm551 = vcmp.ne.s32.totalorder %v547, %v549
      %vm552 = vmpackc.low %vm551, %vm550
      %v553 = vunpack.c.l.b16 %v483
      %v554 = vunpack.c.h.b16 %v483
      %v555 = vunpack.c.l.b16 0
      %v556 = vunpack.c.h.b16 0
      %vm557 = vcmp.ne.s32.totalorder %v553, %v555
      %vm558 = vcmp.ne.s32.totalorder %v554, %v556
      %vm559 = vmpackc.low %vm558, %vm557
      %v560 = vunpack.c.l.b16 %v493
      %v561 = vunpack.c.h.b16 %v493
      %v562 = vunpack.c.l.b16 0
      %v563 = vunpack.c.h.b16 0
      %vm564 = vcmp.ne.s32.totalorder %v560, %v562
      %vm565 = vcmp.ne.s32.totalorder %v561, %v563
      %vm566 = vmpackc.low %vm565, %vm564
      %v567 = vunpack.c.l.b16 %v503
      %v568 = vunpack.c.h.b16 %v503
      %v569 = vunpack.c.l.b16 0
      %v570 = vunpack.c.h.b16 0
      %vm571 = vcmp.ne.s32.totalorder %v567, %v569
      %vm572 = vcmp.ne.s32.totalorder %v568, %v570
      %vm573 = vmpackc.low %vm572, %vm571
      %v574 = vunpack.c.l.b16 %v513
      %v575 = vunpack.c.h.b16 %v513
      %v576 = vunpack.c.l.b16 0
      %v577 = vunpack.c.h.b16 0
      %vm578 = vcmp.ne.s32.totalorder %v574, %v576
      %vm579 = vcmp.ne.s32.totalorder %v575, %v577
      %vm580 = vmpackc.low %vm579, %vm578
      %v581 = vunpack.c.l.b16 %v523
      %v582 = vunpack.c.h.b16 %v523
      %v583 = vunpack.c.l.b16 0
      %v584 = vunpack.c.h.b16 0
      %vm585 = vcmp.ne.s32.totalorder %v581, %v583
      %vm586 = vcmp.ne.s32.totalorder %v582, %v584
      %vm587 = vmpackc.low %vm586, %vm585
      %v588 = vunpack.c.l.b16 %v533
      %v589 = vunpack.c.h.b16 %v533
      %v590 = vunpack.c.l.b16 0
      %v591 = vunpack.c.h.b16 0
      %vm592 = vcmp.ne.s32.totalorder %v588, %v590
      %vm593 = vcmp.ne.s32.totalorder %v589, %v591
      %vm594 = vmpackc.low %vm593, %vm592
      %v595 = vunpack.c.l.b16 %v538
      %v596 = vunpack.c.h.b16 %v538
      %v597 = vunpack.c.l.b16 0
      %v598 = vunpack.c.h.b16 0
      %vm599 = vcmp.ne.s32.totalorder %v595, %v597
      %vm600 = vcmp.ne.s32.totalorder %v596, %v598
      %vm601 = vmpackc.low %vm600, %vm599
      %v602 = vsel %vm545, %v416, 0
      %v603 = vsel %vm552, %v417, 0
      %v604 = vsel %vm559, %v418, 0
      %v605 = vsel %vm566, %v419, 0
      %v606 = vsel %vm573, %v420, 0
      %v607 = vsel %vm580, %v421, 0
      %v608 = vsel %vm587, %v422, 0
      %v609 = vsel %vm594, %v423, 0
      %v610 = vsel %vm601, %v424, 0
      %v611 = vld [vmem:[%s248] sm:$0xf]
      %v612 = vld [vmem:[%s248 + $0x4] sm:$0xf]
      %s613 = scalar_lea.vmem %s248, 8
      %v614 = vld [vmem:[%s613] sm:$0xf]
      %v615 = vld [vmem:[%s613 + $0x4] sm:$0xf]
      %v624 = vunpack.c.l.b16 %v417
      %v625 = vunpack.c.l.b16 %v418
      %v626 = vunpack.c.l.b16 %v419
      %v627 = vunpack.c.l.b16 %v420
      %v628 = vunpack.c.l.b16 %v421
      %v629 = vunpack.c.l.b16 %v422
      %v630 = vunpack.c.l.b16 %v423
      %v631 = vunpack.c.l.b16 %v424
      %v632 = vpack.c.b16 %v625, %v624
      %v633 = vpack.c.b16 %v627, %v626
      %v634 = vpack.c.b16 %v629, %v628
      %v635 = vpack.c.b16 %v631, %v630
      %v638 = vunpack.c.l.b16 %v614
      %v639 = vunpack.c.l.b16 %v615
      %v640 = vpack.c.b16 %v639, %v638
      %vm642 = vcmask 130048
      %v644 = vsel %vm642, %v632, 0
      %v647 = vsel %vm642, %v633, 0
      %v650 = vsel %vm642, %v634, 0
      %v653 = vsel %vm642, %v635, 0
      %655 = vmatpush.bf16.msra.mxu0 0
      %656 = vmatpush.bf16.msra.mxu0 0
      %657 = vmatpush.bf16.msra.mxu0 0
      %658 = vmatpush.bf16.msra.mxu0 0
      %659 = vmatpush.bf16.msra.mxu0 0
      %660 = vmatpush.bf16.msra.mxu0 0
      %661 = vmatpush.bf16.msra.mxu0 0
      %662 = vmatpush.bf16.msra.mxu0 %v640
      %663 = vmatmul.bf16.gmra.mxu0 %v644
      %v664 = vpop.f32.mrf.mxu0
      %v665 = vadd.f32 0.0, %v664
      %v666 = vpop.f32.mrf.mxu0
      %v667 = vadd.f32 0.0, %v666
      %668 = vmatmul.bf16.gmra.mxu0 %v647
      %v669 = vpop.f32.mrf.mxu0
      %v670 = vadd.f32 0.0, %v669
      %v671 = vpop.f32.mrf.mxu0
      %v672 = vadd.f32 0.0, %v671
      %673 = vmatmul.bf16.gmra.mxu0 %v650
      %v674 = vpop.f32.mrf.mxu0
      %v675 = vadd.f32 0.0, %v674
      %v676 = vpop.f32.mrf.mxu0
      %v677 = vadd.f32 0.0, %v676
      %678 = vmatmul.bf16.gmra.mxu0 %v653
      %v679 = vpop.f32.mrf.mxu0
      %v680 = vadd.f32 0.0, %v679
      %v681 = vpop.f32.mrf.mxu0
      %v682 = vadd.f32 0.0, %v681
      %683 = vdwg.mxu0
      %v693 = vunpack.c.l.b16 %v602
      %v694 = vunpack.c.l.b16 %v603
      %v695 = vunpack.c.l.b16 %v604
      %v696 = vunpack.c.l.b16 %v605
      %v697 = vunpack.c.l.b16 %v606
      %v698 = vunpack.c.l.b16 %v607
      %v699 = vunpack.c.l.b16 %v608
      %v700 = vunpack.c.l.b16 %v609
      %v701 = vunpack.c.l.b16 %v610
      %v702 = vpack.c.b16 %v694, %v693
      %v703 = vpack.c.b16 %v696, %v695
      %v704 = vpack.c.b16 %v698, %v697
      %v705 = vpack.c.b16 %v700, %v699
      %v706 = vpack.c.b16 %v701, %v701
      %vm707 = vsmask.f32 4352
      %v709 = vshrl.u32 %v702, 16
      %v711 = vrot.slane %v709, 3
      %v712 = vshll.u32 %v702, 16
      %v714 = vrot.slane %v712, 4
      %v715 = vor.u32 %v711, %v714
      %v717 = vshrl.u32 %v703, 16
      %v719 = vrot.slane %v717, 3
      %v720 = vshll.u32 %v703, 16
      %v722 = vrot.slane %v720, 4
      %v723 = vor.u32 %v719, %v722
      %v724 = vsel %vm707, %v715, %v723
      %v726 = vshrl.u32 %v704, 16
      %v728 = vrot.slane %v726, 3
      %v729 = vshll.u32 %v704, 16
      %v731 = vrot.slane %v729, 4
      %v732 = vor.u32 %v728, %v731
      %v733 = vsel %vm707, %v723, %v732
      %v735 = vshrl.u32 %v705, 16
      %v737 = vrot.slane %v735, 3
      %v738 = vshll.u32 %v705, 16
      %v740 = vrot.slane %v738, 4
      %v741 = vor.u32 %v737, %v740
      %v742 = vsel %vm707, %v732, %v741
      %v744 = vshrl.u32 %v706, 16
      %v746 = vrot.slane %v744, 3
      %v747 = vshll.u32 %v706, 16
      %v749 = vrot.slane %v747, 4
      %v750 = vor.u32 %v746, %v749
      %v751 = vsel %vm707, %v741, %v750
      %v754 = vunpack.c.l.b16 %v611
      %v755 = vunpack.c.l.b16 %v612
      %v756 = vpack.c.b16 %v755, %v754
      %v759 = vsel %vm642, %v724, 0
      %v762 = vsel %vm642, %v733, 0
      %v765 = vsel %vm642, %v742, 0
      %v768 = vsel %vm642, %v751, 0
      %770 = vmatpush.bf16.msra.mxu0 0
      %771 = vmatpush.bf16.msra.mxu0 0
      %772 = vmatpush.bf16.msra.mxu0 0
      %773 = vmatpush.bf16.msra.mxu0 0
      %774 = vmatpush.bf16.msra.mxu0 0
      %775 = vmatpush.bf16.msra.mxu0 0
      %776 = vmatpush.bf16.msra.mxu0 0
      %777 = vmatpush.bf16.msra.mxu0 %v756
      %778 = vmatmul.bf16.gmra.mxu0 %v759
      %v779 = vpop.f32.mrf.mxu0
      %v780 = vadd.f32 %v665, %v779
      %v781 = vpop.f32.mrf.mxu0
      %v782 = vadd.f32 %v667, %v781
      %783 = vmatmul.bf16.gmra.mxu0 %v762
      %v784 = vpop.f32.mrf.mxu0
      %v785 = vadd.f32 %v670, %v784
      %v786 = vpop.f32.mrf.mxu0
      %v787 = vadd.f32 %v672, %v786
      %788 = vmatmul.bf16.gmra.mxu0 %v765
      %v789 = vpop.f32.mrf.mxu0
      %v790 = vadd.f32 %v675, %v789
      %v791 = vpop.f32.mrf.mxu0
      %v792 = vadd.f32 %v677, %v791
      %793 = vmatmul.bf16.gmra.mxu0 %v768
      %v794 = vpop.f32.mrf.mxu0
      %v795 = vadd.f32 %v680, %v794
      %v796 = vpop.f32.mrf.mxu0
      %v797 = vadd.f32 %v682, %v796
      %798 = vdwg.mxu0
      %v799 = vld [vmem:[#allocation2 + $0x4] sm:$0xf]
      %v800 = vld [vmem:[#allocation2 + $0x8] sm:$0xf]
      %v801 = vld [vmem:[#allocation2 + $0xc] sm:$0xf]
      %v802 = vld [vmem:[#allocation2 + $0x10] sm:$0xf]
      %v803 = vld [vmem:[#allocation2 + $0x14] sm:$0xf]
      %v804 = vld [vmem:[#allocation2 + $0x18] sm:$0xf]
      %v805 = vld [vmem:[#allocation2 + $0x1c] sm:$0xf]
      %v806 = vld [vmem:[#allocation2 + $0x20] sm:$0xf]
      %v807 = vld [vmem:[#allocation2 + $0x24] sm:$0x1]
      %v808 = vsel %vm408, 1, 0
      %v809 = vsel %vm409, 1, 0
      %v810 = vsel %vm410, 1, 0
      %v811 = vsel %vm411, 1, 0
      %v812 = vsel %vm412, 1, 0
      %v813 = vsel %vm413, 1, 0
      %v814 = vsel %vm414, 1, 0
      %v815 = vsel %vm415, 1, 0
      %vm816 = vcmp.eq.s32.totalorder %v808, 1
      %vm817 = vcmp.eq.s32.totalorder %v809, 1
      %vm818 = vcmp.eq.s32.totalorder %v810, 1
      %vm819 = vcmp.eq.s32.totalorder %v811, 1
      %vm820 = vcmp.eq.s32.totalorder %v812, 1
      %vm821 = vcmp.eq.s32.totalorder %v813, 1
      %vm822 = vcmp.eq.s32.totalorder %v814, 1
      %vm823 = vcmp.eq.s32.totalorder %v815, 1
      %vm824 = vmpackc.low %vm816, %vm816
      %vm825 = vmpackc.low %vm817, %vm817
      %vm826 = vmpackc.low %vm818, %vm818
      %vm827 = vmpackc.low %vm819, %vm819
      %vm828 = vmpackc.low %vm820, %vm820
      %vm829 = vmpackc.low %vm821, %vm821
      %vm830 = vmpackc.low %vm822, %vm822
      %vm831 = vmpackc.low %vm823, %vm823
      %v832 = vsel %vm824, 65537, 0
      %v833 = vsel %vm825, 65537, 0
      %v834 = vsel %vm826, 65537, 0
      %v835 = vsel %vm827, 65537, 0
      %v836 = vsel %vm828, 65537, 0
      %v837 = vsel %vm829, 65537, 0
      %v838 = vsel %vm830, 65537, 0
      %v839 = vsel %vm831, 65537, 0
      %vm840 = vsmask.f32 256
      %vm841 = vsmask.f32 4368
      %vm842 = vmor %vm840, %vm841
      %v844 = vshrl.u32 %v832, 16
      %v846 = vrot.slane %v844, 7
      %v847 = vshll.u32 %v832, 16
      %v849 = vor.u32 %v846, %v847
      %v850 = vrot.slane %v846, 4
      %v852 = vshrl.u32 %v833, 16
      %v854 = vrot.slane %v852, 7
      %v855 = vshll.u32 %v833, 16
      %v857 = vor.u32 %v854, %v855
      %v858 = vsel %vm842, %v850, %v857
      %v859 = vrot.slane %v854, 4
      %v861 = vshrl.u32 %v834, 16
      %v863 = vrot.slane %v861, 7
      %v864 = vshll.u32 %v834, 16
      %v866 = vor.u32 %v863, %v864
      %v867 = vsel %vm842, %v859, %v866
      %v868 = vrot.slane %v863, 4
      %v870 = vshrl.u32 %v835, 16
      %v872 = vrot.slane %v870, 7
      %v873 = vshll.u32 %v835, 16
      %v875 = vor.u32 %v872, %v873
      %v876 = vsel %vm842, %v868, %v875
      %v877 = vrot.slane %v872, 4
      %v879 = vshrl.u32 %v836, 16
      %v881 = vrot.slane %v879, 7
      %v882 = vshll.u32 %v836, 16
      %v884 = vor.u32 %v881, %v882
      %v885 = vsel %vm842, %v877, %v884
      %v886 = vrot.slane %v881, 4
      %v888 = vshrl.u32 %v837, 16
      %v890 = vrot.slane %v888, 7
      %v891 = vshll.u32 %v837, 16
      %v893 = vor.u32 %v890, %v891
      %v894 = vsel %vm842, %v886, %v893
      %v895 = vrot.slane %v890, 4
      %v897 = vshrl.u32 %v838, 16
      %v899 = vrot.slane %v897, 7
      %v900 = vshll.u32 %v838, 16
      %v902 = vor.u32 %v899, %v900
      %v903 = vsel %vm842, %v895, %v902
      %v904 = vrot.slane %v899, 4
      %v906 = vshrl.u32 %v839, 16
      %v908 = vrot.slane %v906, 7
      %v909 = vshll.u32 %v839, 16
      %v911 = vor.u32 %v908, %v909
      %v912 = vsel %vm842, %v904, %v911
      %v913 = vrot.slane %v908, 4
      %v914 = vunpack.c.l.b16 %v849
      %v915 = vunpack.c.h.b16 %v849
      %v916 = vunpack.c.l.b16 0
      %v917 = vunpack.c.h.b16 0
      %vm918 = vcmp.ne.s32.totalorder %v914, %v916
      %vm919 = vcmp.ne.s32.totalorder %v915, %v917
      %vm920 = vmpackc.low %vm919, %vm918
      %v921 = vunpack.c.l.b16 %v858
      %v922 = vunpack.c.h.b16 %v858
      %v923 = vunpack.c.l.b16 0
      %v924 = vunpack.c.h.b16 0
      %vm925 = vcmp.ne.s32.totalorder %v921, %v923
      %vm926 = vcmp.ne.s32.totalorder %v922, %v924
      %vm927 = vmpackc.low %vm926, %vm925
      %v928 = vunpack.c.l.b16 %v867
      %v929 = vunpack.c.h.b16 %v867
      %v930 = vunpack.c.l.b16 0
      %v931 = vunpack.c.h.b16 0
      %vm932 = vcmp.ne.s32.totalorder %v928, %v930
      %vm933 = vcmp.ne.s32.totalorder %v929, %v931
      %vm934 = vmpackc.low %vm933, %vm932
      %v935 = vunpack.c.l.b16 %v876
      %v936 = vunpack.c.h.b16 %v876
      %v937 = vunpack.c.l.b16 0
      %v938 = vunpack.c.h.b16 0
      %vm939 = vcmp.ne.s32.totalorder %v935, %v937
      %vm940 = vcmp.ne.s32.totalorder %v936, %v938
      %vm941 = vmpackc.low %vm940, %vm939
      %v942 = vunpack.c.l.b16 %v885
      %v943 = vunpack.c.h.b16 %v885
      %v944 = vunpack.c.l.b16 0
      %v945 = vunpack.c.h.b16 0
      %vm946 = vcmp.ne.s32.totalorder %v942, %v944
      %vm947 = vcmp.ne.s32.totalorder %v943, %v945
      %vm948 = vmpackc.low %vm947, %vm946
      %v949 = vunpack.c.l.b16 %v894
      %v950 = vunpack.c.h.b16 %v894
      %v951 = vunpack.c.l.b16 0
      %v952 = vunpack.c.h.b16 0
      %vm953 = vcmp.ne.s32.totalorder %v949, %v951
      %vm954 = vcmp.ne.s32.totalorder %v950, %v952
      %vm955 = vmpackc.low %vm954, %vm953
      %v956 = vunpack.c.l.b16 %v903
      %v957 = vunpack.c.h.b16 %v903
      %v958 = vunpack.c.l.b16 0
      %v959 = vunpack.c.h.b16 0
      %vm960 = vcmp.ne.s32.totalorder %v956, %v958
      %vm961 = vcmp.ne.s32.totalorder %v957, %v959
      %vm962 = vmpackc.low %vm961, %vm960
      %v963 = vunpack.c.l.b16 %v912
      %v964 = vunpack.c.h.b16 %v912
      %v965 = vunpack.c.l.b16 0
      %v966 = vunpack.c.h.b16 0
      %vm967 = vcmp.ne.s32.totalorder %v963, %v965
      %vm968 = vcmp.ne.s32.totalorder %v964, %v966
      %vm969 = vmpackc.low %vm968, %vm967
      %v970 = vunpack.c.l.b16 %v913
      %v971 = vunpack.c.h.b16 %v913
      %v972 = vunpack.c.l.b16 0
      %v973 = vunpack.c.h.b16 0
      %vm974 = vcmp.ne.s32.totalorder %v970, %v972
      %vm975 = vcmp.ne.s32.totalorder %v971, %v973
      %vm976 = vmpackc.low %vm975, %vm974
      %v977 = vsel %vm920, %v799, 0
      %v978 = vsel %vm927, %v800, 0
      %v979 = vsel %vm934, %v801, 0
      %v980 = vsel %vm941, %v802, 0
      %v981 = vsel %vm948, %v803, 0
      %v982 = vsel %vm955, %v804, 0
      %v983 = vsel %vm962, %v805, 0
      %v984 = vsel %vm969, %v806, 0
      %v985 = vsel %vm976, %v807, 0
      %s986 = scalar_lea.vmem %s248, 16
      %v987 = vld [vmem:[%s986] sm:$0xf]
      %v988 = vld [vmem:[%s986 + $0x4] sm:$0xf]
      %v998 = vunpack.c.l.b16 %v977
      %v999 = vunpack.c.l.b16 %v978
      %v1000 = vunpack.c.l.b16 %v979
      %v1001 = vunpack.c.l.b16 %v980
      %v1002 = vunpack.c.l.b16 %v981
      %v1003 = vunpack.c.l.b16 %v982
      %v1004 = vunpack.c.l.b16 %v983
      %v1005 = vunpack.c.l.b16 %v984
      %v1006 = vunpack.c.l.b16 %v985
      %v1007 = vpack.c.b16 %v999, %v998
      %v1008 = vpack.c.b16 %v1001, %v1000
      %v1009 = vpack.c.b16 %v1003, %v1002
      %v1010 = vpack.c.b16 %v1005, %v1004
      %v1011 = vpack.c.b16 %v1006, %v1006
      %vm1012 = vsmask.f32 7424
      %v1014 = vshrl.u32 %v1007, 16
      %v1016 = vshll.u32 %v1007, 16
      %v1018 = vrot.slane %v1016, 1
      %v1019 = vor.u32 %v1014, %v1018
      %v1021 = vshll.u32 %v1008, 16
      %v1023 = vrot.slane %v1021, 1
      %v1024 = vsel %vm1012, %v1019, %v1023
      %v1025 = vshrl.u32 %v1008, 16
      %v1027 = vor.u32 %v1025, %v1023
      %v1029 = vshll.u32 %v1009, 16
      %v1031 = vrot.slane %v1029, 1
      %v1032 = vsel %vm1012, %v1027, %v1031
      %v1033 = vshrl.u32 %v1009, 16
      %v1035 = vor.u32 %v1033, %v1031
      %v1037 = vshll.u32 %v1010, 16
      %v1039 = vrot.slane %v1037, 1
      %v1040 = vsel %vm1012, %v1035, %v1039
      %v1041 = vshrl.u32 %v1010, 16
      %v1043 = vor.u32 %v1041, %v1039
      %v1045 = vshll.u32 %v1011, 16
      %v1047 = vrot.slane %v1045, 1
      %v1048 = vsel %vm1012, %v1043, %v1047
      %v1051 = vunpack.c.l.b16 %v987
      %v1052 = vunpack.c.l.b16 %v988
      %v1053 = vpack.c.b16 %v1052, %v1051
      %v1056 = vsel %vm642, %v1024, 0
      %v1059 = vsel %vm642, %v1032, 0
      %v1062 = vsel %vm642, %v1040, 0
      %v1065 = vsel %vm642, %v1048, 0
      %1067 = vmatpush.bf16.msra.mxu0 0
      %1068 = vmatpush.bf16.msra.mxu0 0
      %1069 = vmatpush.bf16.msra.mxu0 0
      %1070 = vmatpush.bf16.msra.mxu0 0
      %1071 = vmatpush.bf16.msra.mxu0 0
      %1072 = vmatpush.bf16.msra.mxu0 0
      %1073 = vmatpush.bf16.msra.mxu0 0
      %1074 = vmatpush.bf16.msra.mxu0 %v1053
      %1075 = vmatmul.bf16.gmra.mxu0 %v1056
      %v1076 = vpop.f32.mrf.mxu0
      %v1077 = vadd.f32 0.0, %v1076
      %v1078 = vpop.f32.mrf.mxu0
      %v1079 = vadd.f32 0.0, %v1078
      %1080 = vmatmul.bf16.gmra.mxu0 %v1059
      %v1081 = vpop.f32.mrf.mxu0
      %v1082 = vadd.f32 0.0, %v1081
      %v1083 = vpop.f32.mrf.mxu0
      %v1084 = vadd.f32 0.0, %v1083
      %1085 = vmatmul.bf16.gmra.mxu0 %v1062
      %v1086 = vpop.f32.mrf.mxu0
      %v1087 = vadd.f32 0.0, %v1086
      %v1088 = vpop.f32.mrf.mxu0
      %v1089 = vadd.f32 0.0, %v1088
      %1090 = vmatmul.bf16.gmra.mxu0 %v1065
      %v1091 = vpop.f32.mrf.mxu0
      %v1092 = vadd.f32 0.0, %v1091
      %v1093 = vpop.f32.mrf.mxu0
      %v1094 = vadd.f32 0.0, %v1093
      %1095 = vdwg.mxu0
      %v1096 = vadd.f32 %v780, %v1077
      %v1097 = vadd.f32 %v782, %v1079
      %v1098 = vadd.f32 %v785, %v1082
      %v1099 = vadd.f32 %v787, %v1084
      %v1100 = vadd.f32 %v790, %v1087
      %v1101 = vadd.f32 %v792, %v1089
      %v1102 = vadd.f32 %v795, %v1092
      %v1103 = vadd.f32 %v797, %v1094
      %v1104 = vld [vmem:[#allocation2 + $0x4] sm:$0x8]
      %v1105 = vld [vmem:[#allocation2 + $0x24] sm:$0xf]
      %v1106 = vsel %vm545, %v1104, 0
      %v1107 = vsel %vm552, %v800, 0
      %v1108 = vsel %vm559, %v801, 0
      %v1109 = vsel %vm566, %v802, 0
      %v1110 = vsel %vm573, %v803, 0
      %v1111 = vsel %vm580, %v804, 0
      %v1112 = vsel %vm587, %v805, 0
      %v1113 = vsel %vm594, %v806, 0
      %v1114 = vsel %vm601, %v1105, 0
      %s1115 = scalar_lea.vmem %s248, 24
      %v1116 = vld [vmem:[%s1115] sm:$0xf]
      %v1117 = vld [vmem:[%s1115 + $0x4] sm:$0xf]
      %v1127 = vunpack.c.l.b16 %v1106
      %v1128 = vunpack.c.l.b16 %v1107
      %v1129 = vunpack.c.l.b16 %v1108
      %v1130 = vunpack.c.l.b16 %v1109
      %v1131 = vunpack.c.l.b16 %v1110
      %v1132 = vunpack.c.l.b16 %v1111
      %v1133 = vunpack.c.l.b16 %v1112
      %v1134 = vunpack.c.l.b16 %v1113
      %v1135 = vunpack.c.l.b16 %v1114
      %v1136 = vpack.c.b16 %v1128, %v1127
      %v1137 = vpack.c.b16 %v1130, %v1129
      %v1138 = vpack.c.b16 %v1132, %v1131
      %v1139 = vpack.c.b16 %v1134, %v1133
      %v1140 = vpack.c.b16 %v1135, %v1135
      %v1142 = vshrl.u32 %v1136, 16
      %v1144 = vrot.slane %v1142, 3
      %v1145 = vshll.u32 %v1136, 16
      %v1147 = vrot.slane %v1145, 4
      %v1148 = vor.u32 %v1144, %v1147
      %v1150 = vshrl.u32 %v1137, 16
      %v1152 = vrot.slane %v1150, 3
      %v1153 = vshll.u32 %v1137, 16
      %v1155 = vrot.slane %v1153, 4
      %v1156 = vor.u32 %v1152, %v1155
      %v1157 = vsel %vm707, %v1148, %v1156
      %v1159 = vshrl.u32 %v1138, 16
      %v1161 = vrot.slane %v1159, 3
      %v1162 = vshll.u32 %v1138, 16
      %v1164 = vrot.slane %v1162, 4
      %v1165 = vor.u32 %v1161, %v1164
      %v1166 = vsel %vm707, %v1156, %v1165
      %v1168 = vshrl.u32 %v1139, 16
      %v1170 = vrot.slane %v1168, 3
      %v1171 = vshll.u32 %v1139, 16
      %v1173 = vrot.slane %v1171, 4
      %v1174 = vor.u32 %v1170, %v1173
      %v1175 = vsel %vm707, %v1165, %v1174
      %v1177 = vshrl.u32 %v1140, 16
      %v1179 = vrot.slane %v1177, 3
      %v1180 = vshll.u32 %v1140, 16
      %v1182 = vrot.slane %v1180, 4
      %v1183 = vor.u32 %v1179, %v1182
      %v1184 = vsel %vm707, %v1174, %v1183
      %v1187 = vunpack.c.l.b16 %v1116
      %v1188 = vunpack.c.l.b16 %v1117
      %v1189 = vpack.c.b16 %v1188, %v1187
      %v1192 = vsel %vm642, %v1157, 0
      %v1195 = vsel %vm642, %v1166, 0
      %v1198 = vsel %vm642, %v1175, 0
      %v1201 = vsel %vm642, %v1184, 0
      %1203 = vmatpush.bf16.msra.mxu0 0
      %1204 = vmatpush.bf16.msra.mxu0 0
      %1205 = vmatpush.bf16.msra.mxu0 0
      %1206 = vmatpush.bf16.msra.mxu0 0
      %1207 = vmatpush.bf16.msra.mxu0 0
      %1208 = vmatpush.bf16.msra.mxu0 0
      %1209 = vmatpush.bf16.msra.mxu0 0
      %1210 = vmatpush.bf16.msra.mxu0 %v1189
      %1211 = vmatmul.bf16.gmra.mxu0 %v1192
      %v1212 = vpop.f32.mrf.mxu0
      %v1213 = vadd.f32 0.0, %v1212
      %v1214 = vpop.f32.mrf.mxu0
      %v1215 = vadd.f32 0.0, %v1214
      %1216 = vmatmul.bf16.gmra.mxu0 %v1195
      %v1217 = vpop.f32.mrf.mxu0
      %v1218 = vadd.f32 0.0, %v1217
      %v1219 = vpop.f32.mrf.mxu0
      %v1220 = vadd.f32 0.0, %v1219
      %1221 = vmatmul.bf16.gmra.mxu0 %v1198
      %v1222 = vpop.f32.mrf.mxu0
      %v1223 = vadd.f32 0.0, %v1222
      %v1224 = vpop.f32.mrf.mxu0
      %v1225 = vadd.f32 0.0, %v1224
      %1226 = vmatmul.bf16.gmra.mxu0 %v1201
      %v1227 = vpop.f32.mrf.mxu0
      %v1228 = vadd.f32 0.0, %v1227
      %v1229 = vpop.f32.mrf.mxu0
      %v1230 = vadd.f32 0.0, %v1229
      %1231 = vdwg.mxu0
      %v1232 = vadd.f32 %v1096, %v1213
      %v1233 = vadd.f32 %v1097, %v1215
      %v1234 = vadd.f32 %v1098, %v1218
      %v1235 = vadd.f32 %v1099, %v1220
      %v1236 = vadd.f32 %v1100, %v1223
      %v1237 = vadd.f32 %v1101, %v1225
      %v1238 = vadd.f32 %v1102, %v1228
      %v1239 = vadd.f32 %v1103, %v1230
      %s1240 = scalar_lea.vmem %s248, 32
      %v1241 = vld [vmem:[%s1240] sm:$0xf]
      %v1242 = vld [vmem:[%s1240 + $0x4] sm:$0xf]
      %v1251 = vunpack.c.l.b16 %v800
      %v1252 = vunpack.c.l.b16 %v801
      %v1253 = vunpack.c.l.b16 %v802
      %v1254 = vunpack.c.l.b16 %v803
      %v1255 = vunpack.c.l.b16 %v804
      %v1256 = vunpack.c.l.b16 %v805
      %v1257 = vunpack.c.l.b16 %v806
      %v1258 = vunpack.c.l.b16 %v1105
      %v1259 = vpack.c.b16 %v1252, %v1251
      %v1260 = vpack.c.b16 %v1254, %v1253
      %v1261 = vpack.c.b16 %v1256, %v1255
      %v1262 = vpack.c.b16 %v1258, %v1257
      %v1265 = vunpack.c.l.b16 %v1241
      %v1266 = vunpack.c.l.b16 %v1242
      %v1267 = vpack.c.b16 %v1266, %v1265
      %v1270 = vsel %vm642, %v1259, 0
      %v1273 = vsel %vm642, %v1260, 0
      %v1276 = vsel %vm642, %v1261, 0
      %v1279 = vsel %vm642, %v1262, 0
      %1281 = vmatpush.bf16.msra.mxu0 0
      %1282 = vmatpush.bf16.msra.mxu0 0
      %1283 = vmatpush.bf16.msra.mxu0 0
      %1284 = vmatpush.bf16.msra.mxu0 0
      %1285 = vmatpush.bf16.msra.mxu0 0
      %1286 = vmatpush.bf16.msra.mxu0 0
      %1287 = vmatpush.bf16.msra.mxu0 0
      %1288 = vmatpush.bf16.msra.mxu0 %v1267
      %1289 = vmatmul.bf16.gmra.mxu0 %v1270
      %v1290 = vpop.f32.mrf.mxu0
      %v1291 = vadd.f32 0.0, %v1290
      %v1292 = vpop.f32.mrf.mxu0
      %v1293 = vadd.f32 0.0, %v1292
      %1294 = vmatmul.bf16.gmra.mxu0 %v1273
      %v1295 = vpop.f32.mrf.mxu0
      %v1296 = vadd.f32 0.0, %v1295
      %v1297 = vpop.f32.mrf.mxu0
      %v1298 = vadd.f32 0.0, %v1297
      %1299 = vmatmul.bf16.gmra.mxu0 %v1276
      %v1300 = vpop.f32.mrf.mxu0
      %v1301 = vadd.f32 0.0, %v1300
      %v1302 = vpop.f32.mrf.mxu0
      %v1303 = vadd.f32 0.0, %v1302
      %1304 = vmatmul.bf16.gmra.mxu0 %v1279
      %v1305 = vpop.f32.mrf.mxu0
      %v1306 = vadd.f32 0.0, %v1305
      %v1307 = vpop.f32.mrf.mxu0
      %v1308 = vadd.f32 0.0, %v1307
      %1309 = vdwg.mxu0
      %v1310 = vadd.f32 %v1232, %v1291
      %v1311 = vadd.f32 %v1233, %v1293
      %v1312 = vadd.f32 %v1234, %v1296
      %v1313 = vadd.f32 %v1235, %v1298
      %v1314 = vadd.f32 %v1236, %v1301
      %v1315 = vadd.f32 %v1237, %v1303
      %v1316 = vadd.f32 %v1238, %v1306
      %v1317 = vadd.f32 %v1239, %v1308
      %v1318 = vld [vmem:[#allocation2 + $0x8] sm:$0xf]
      %v1319 = vld [vmem:[#allocation2 + $0xc] sm:$0xf]
      %v1320 = vld [vmem:[#allocation2 + $0x10] sm:$0xf]
      %v1321 = vld [vmem:[#allocation2 + $0x14] sm:$0xf]
      %v1322 = vld [vmem:[#allocation2 + $0x18] sm:$0xf]
      %v1323 = vld [vmem:[#allocation2 + $0x1c] sm:$0xf]
      %v1324 = vld [vmem:[#allocation2 + $0x20] sm:$0xf]
      %v1325 = vld [vmem:[#allocation2 + $0x24] sm:$0xf]
      %v1326 = vld [vmem:[#allocation2 + $0x28] sm:$0x1]
      %v1327 = vsel %vm920, %v1318, 0
      %v1328 = vsel %vm927, %v1319, 0
      %v1329 = vsel %vm934, %v1320, 0
      %v1330 = vsel %vm941, %v1321, 0
      %v1331 = vsel %vm948, %v1322, 0
      %v1332 = vsel %vm955, %v1323, 0
      %v1333 = vsel %vm962, %v1324, 0
      %v1334 = vsel %vm969, %v1325, 0
      %v1335 = vsel %vm976, %v1326, 0
      %s1336 = scalar_lea.vmem %s248, 40
      %v1337 = vld [vmem:[%s1336] sm:$0xf]
      %v1338 = vld [vmem:[%s1336 + $0x4] sm:$0xf]
      %v1348 = vunpack.c.l.b16 %v1327
      %v1349 = vunpack.c.l.b16 %v1328
      %v1350 = vunpack.c.l.b16 %v1329
      %v1351 = vunpack.c.l.b16 %v1330
      %v1352 = vunpack.c.l.b16 %v1331
      %v1353 = vunpack.c.l.b16 %v1332
      %v1354 = vunpack.c.l.b16 %v1333
      %v1355 = vunpack.c.l.b16 %v1334
      %v1356 = vunpack.c.l.b16 %v1335
      %v1357 = vpack.c.b16 %v1349, %v1348
      %v1358 = vpack.c.b16 %v1351, %v1350
      %v1359 = vpack.c.b16 %v1353, %v1352
      %v1360 = vpack.c.b16 %v1355, %v1354
      %v1361 = vpack.c.b16 %v1356, %v1356
      %v1363 = vshrl.u32 %v1357, 16
      %v1365 = vshll.u32 %v1357, 16
      %v1367 = vrot.slane %v1365, 1
      %v1368 = vor.u32 %v1363, %v1367
      %v1370 = vshll.u32 %v1358, 16
      %v1372 = vrot.slane %v1370, 1
      %v1373 = vsel %vm1012, %v1368, %v1372
      %v1374 = vshrl.u32 %v1358, 16
      %v1376 = vor.u32 %v1374, %v1372
      %v1378 = vshll.u32 %v1359, 16
      %v1380 = vrot.slane %v1378, 1
      %v1381 = vsel %vm1012, %v1376, %v1380
      %v1382 = vshrl.u32 %v1359, 16
      %v1384 = vor.u32 %v1382, %v1380
      %v1386 = vshll.u32 %v1360, 16
      %v1388 = vrot.slane %v1386, 1
      %v1389 = vsel %vm1012, %v1384, %v1388
      %v1390 = vshrl.u32 %v1360, 16
      %v1392 = vor.u32 %v1390, %v1388
      %v1394 = vshll.u32 %v1361, 16
      %v1396 = vrot.slane %v1394, 1
      %v1397 = vsel %vm1012, %v1392, %v1396
      %v1400 = vunpack.c.l.b16 %v1337
      %v1401 = vunpack.c.l.b16 %v1338
      %v1402 = vpack.c.b16 %v1401, %v1400
      %v1405 = vsel %vm642, %v1373, 0
      %v1408 = vsel %vm642, %v1381, 0
      %v1411 = vsel %vm642, %v1389, 0
      %v1414 = vsel %vm642, %v1397, 0
      %1416 = vmatpush.bf16.msra.mxu0 0
      %1417 = vmatpush.bf16.msra.mxu0 0
      %1418 = vmatpush.bf16.msra.mxu0 0
      %1419 = vmatpush.bf16.msra.mxu0 0
      %1420 = vmatpush.bf16.msra.mxu0 0
      %1421 = vmatpush.bf16.msra.mxu0 0
      %1422 = vmatpush.bf16.msra.mxu0 0
      %1423 = vmatpush.bf16.msra.mxu0 %v1402
      %1424 = vmatmul.bf16.gmra.mxu0 %v1405
      %v1425 = vpop.f32.mrf.mxu0
      %v1426 = vadd.f32 0.0, %v1425
      %v1427 = vpop.f32.mrf.mxu0
      %v1428 = vadd.f32 0.0, %v1427
      %1429 = vmatmul.bf16.gmra.mxu0 %v1408
      %v1430 = vpop.f32.mrf.mxu0
      %v1431 = vadd.f32 0.0, %v1430
      %v1432 = vpop.f32.mrf.mxu0
      %v1433 = vadd.f32 0.0, %v1432
      %1434 = vmatmul.bf16.gmra.mxu0 %v1411
      %v1435 = vpop.f32.mrf.mxu0
      %v1436 = vadd.f32 0.0, %v1435
      %v1437 = vpop.f32.mrf.mxu0
      %v1438 = vadd.f32 0.0, %v1437
      %1439 = vmatmul.bf16.gmra.mxu0 %v1414
      %v1440 = vpop.f32.mrf.mxu0
      %v1441 = vadd.f32 0.0, %v1440
      %v1442 = vpop.f32.mrf.mxu0
      %v1443 = vadd.f32 0.0, %v1442
      %1444 = vdwg.mxu0
      %v1445 = vadd.f32 %v1310, %v1426
      %v1446 = vadd.f32 %v1311, %v1428
      %v1447 = vadd.f32 %v1312, %v1431
      %v1448 = vadd.f32 %v1313, %v1433
      %v1449 = vadd.f32 %v1314, %v1436
      %v1450 = vadd.f32 %v1315, %v1438
      %v1451 = vadd.f32 %v1316, %v1441
      %v1452 = vadd.f32 %v1317, %v1443
      %v1453 = vld [vmem:[#allocation2 + $0x8] sm:$0x8]
      %v1454 = vld [vmem:[#allocation2 + $0x28] sm:$0xf]
      %v1455 = vsel %vm545, %v1453, 0
      %v1456 = vsel %vm552, %v1319, 0
      %v1457 = vsel %vm559, %v1320, 0
      %v1458 = vsel %vm566, %v1321, 0
      %v1459 = vsel %vm573, %v1322, 0
      %v1460 = vsel %vm580, %v1323, 0
      %v1461 = vsel %vm587, %v1324, 0
      %v1462 = vsel %vm594, %v1325, 0
      %v1463 = vsel %vm601, %v1454, 0
      %s1464 = scalar_lea.vmem %s248, 48
      %v1465 = vld [vmem:[%s1464] sm:$0xf]
      %v1466 = vld [vmem:[%s1464 + $0x4] sm:$0xf]
      %v1476 = vunpack.c.l.b16 %v1455
      %v1477 = vunpack.c.l.b16 %v1456
      %v1478 = vunpack.c.l.b16 %v1457
      %v1479 = vunpack.c.l.b16 %v1458
      %v1480 = vunpack.c.l.b16 %v1459
      %v1481 = vunpack.c.l.b16 %v1460
      %v1482 = vunpack.c.l.b16 %v1461
      %v1483 = vunpack.c.l.b16 %v1462
      %v1484 = vunpack.c.l.b16 %v1463
      %v1485 = vpack.c.b16 %v1477, %v1476
      %v1486 = vpack.c.b16 %v1479, %v1478
      %v1487 = vpack.c.b16 %v1481, %v1480
      %v1488 = vpack.c.b16 %v1483, %v1482
      %v1489 = vpack.c.b16 %v1484, %v1484
      %v1491 = vshrl.u32 %v1485, 16
      %v1493 = vrot.slane %v1491, 3
      %v1494 = vshll.u32 %v1485, 16
      %v1496 = vrot.slane %v1494, 4
      %v1497 = vor.u32 %v1493, %v1496
      %v1499 = vshrl.u32 %v1486, 16
      %v1501 = vrot.slane %v1499, 3
      %v1502 = vshll.u32 %v1486, 16
      %v1504 = vrot.slane %v1502, 4
      %v1505 = vor.u32 %v1501, %v1504
      %v1506 = vsel %vm707, %v1497, %v1505
      %v1508 = vshrl.u32 %v1487, 16
      %v1510 = vrot.slane %v1508, 3
      %v1511 = vshll.u32 %v1487, 16
      %v1513 = vrot.slane %v1511, 4
      %v1514 = vor.u32 %v1510, %v1513
      %v1515 = vsel %vm707, %v1505, %v1514
      %v1517 = vshrl.u32 %v1488, 16
      %v1519 = vrot.slane %v1517, 3
      %v1520 = vshll.u32 %v1488, 16
      %v1522 = vrot.slane %v1520, 4
      %v1523 = vor.u32 %v1519, %v1522
      %v1524 = vsel %vm707, %v1514, %v1523
      %v1526 = vshrl.u32 %v1489, 16
      %v1528 = vrot.slane %v1526, 3
      %v1529 = vshll.u32 %v1489, 16
      %v1531 = vrot.slane %v1529, 4
      %v1532 = vor.u32 %v1528, %v1531
      %v1533 = vsel %vm707, %v1523, %v1532
      %v1536 = vunpack.c.l.b16 %v1465
      %v1537 = vunpack.c.l.b16 %v1466
      %v1538 = vpack.c.b16 %v1537, %v1536
      %v1541 = vsel %vm642, %v1506, 0
      %v1544 = vsel %vm642, %v1515, 0
      %v1547 = vsel %vm642, %v1524, 0
      %v1550 = vsel %vm642, %v1533, 0
      %1552 = vmatpush.bf16.msra.mxu0 0
      %1553 = vmatpush.bf16.msra.mxu0 0
      %1554 = vmatpush.bf16.msra.mxu0 0
      %1555 = vmatpush.bf16.msra.mxu0 0
      %1556 = vmatpush.bf16.msra.mxu0 0
      %1557 = vmatpush.bf16.msra.mxu0 0
      %1558 = vmatpush.bf16.msra.mxu0 0
      %1559 = vmatpush.bf16.msra.mxu0 %v1538
      %1560 = vmatmul.bf16.gmra.mxu0 %v1541
      %v1561 = vpop.f32.mrf.mxu0
      %v1562 = vadd.f32 0.0, %v1561
      %v1563 = vpop.f32.mrf.mxu0
      %v1564 = vadd.f32 0.0, %v1563
      %1565 = vmatmul.bf16.gmra.mxu0 %v1544
      %v1566 = vpop.f32.mrf.mxu0
      %v1567 = vadd.f32 0.0, %v1566
      %v1568 = vpop.f32.mrf.mxu0
      %v1569 = vadd.f32 0.0, %v1568
      %1570 = vmatmul.bf16.gmra.mxu0 %v1547
      %v1571 = vpop.f32.mrf.mxu0
      %v1572 = vadd.f32 0.0, %v1571
      %v1573 = vpop.f32.mrf.mxu0
      %v1574 = vadd.f32 0.0, %v1573
      %1575 = vmatmul.bf16.gmra.mxu0 %v1550
      %v1576 = vpop.f32.mrf.mxu0
      %v1577 = vadd.f32 0.0, %v1576
      %v1578 = vpop.f32.mrf.mxu0
      %v1579 = vadd.f32 0.0, %v1578
      %1580 = vdwg.mxu0
      %v1581 = vadd.f32 %v1445, %v1562
      %v1582 = vadd.f32 %v1446, %v1564
      %v1583 = vadd.f32 %v1447, %v1567
      %v1584 = vadd.f32 %v1448, %v1569
      %v1585 = vadd.f32 %v1449, %v1572
      %v1586 = vadd.f32 %v1450, %v1574
      %v1587 = vadd.f32 %v1451, %v1577
      %v1588 = vadd.f32 %v1452, %v1579
      %s1589 = scalar_lea.vmem %s248, 56
      %v1590 = vld [vmem:[%s1589] sm:$0xf]
      %v1591 = vld [vmem:[%s1589 + $0x4] sm:$0xf]
      %v1600 = vunpack.c.l.b16 %v1319
      %v1601 = vunpack.c.l.b16 %v1320
      %v1602 = vunpack.c.l.b16 %v1321
      %v1603 = vunpack.c.l.b16 %v1322
      %v1604 = vunpack.c.l.b16 %v1323
      %v1605 = vunpack.c.l.b16 %v1324
      %v1606 = vunpack.c.l.b16 %v1325
      %v1607 = vunpack.c.l.b16 %v1454
      %v1608 = vpack.c.b16 %v1601, %v1600
      %v1609 = vpack.c.b16 %v1603, %v1602
      %v1610 = vpack.c.b16 %v1605, %v1604
      %v1611 = vpack.c.b16 %v1607, %v1606
      %v1614 = vunpack.c.l.b16 %v1590
      %v1615 = vunpack.c.l.b16 %v1591
      %v1616 = vpack.c.b16 %v1615, %v1614
      %v1619 = vsel %vm642, %v1608, 0
      %v1622 = vsel %vm642, %v1609, 0
      %v1625 = vsel %vm642, %v1610, 0
      %v1628 = vsel %vm642, %v1611, 0
      %1630 = vmatpush.bf16.msra.mxu0 0
      %1631 = vmatpush.bf16.msra.mxu0 0
      %1632 = vmatpush.bf16.msra.mxu0 0
      %1633 = vmatpush.bf16.msra.mxu0 0
      %1634 = vmatpush.bf16.msra.mxu0 0
      %1635 = vmatpush.bf16.msra.mxu0 0
      %1636 = vmatpush.bf16.msra.mxu0 0
      %1637 = vmatpush.bf16.msra.mxu0 %v1616
      %1638 = vmatmul.bf16.gmra.mxu0 %v1619
      %v1639 = vpop.f32.mrf.mxu0
      %v1640 = vadd.f32 0.0, %v1639
      %v1641 = vpop.f32.mrf.mxu0
      %v1642 = vadd.f32 0.0, %v1641
      %1643 = vmatmul.bf16.gmra.mxu0 %v1622
      %v1644 = vpop.f32.mrf.mxu0
      %v1645 = vadd.f32 0.0, %v1644
      %v1646 = vpop.f32.mrf.mxu0
      %v1647 = vadd.f32 0.0, %v1646
      %1648 = vmatmul.bf16.gmra.mxu0 %v1625
      %v1649 = vpop.f32.mrf.mxu0
      %v1650 = vadd.f32 0.0, %v1649
      %v1651 = vpop.f32.mrf.mxu0
      %v1652 = vadd.f32 0.0, %v1651
      %1653 = vmatmul.bf16.gmra.mxu0 %v1628
      %v1654 = vpop.f32.mrf.mxu0
      %v1655 = vadd.f32 0.0, %v1654
      %v1656 = vpop.f32.mrf.mxu0
      %v1657 = vadd.f32 0.0, %v1656
      %1658 = vdwg.mxu0
      %v1659 = vadd.f32 %v1581, %v1640
      %v1660 = vadd.f32 %v1582, %v1642
      %v1661 = vadd.f32 %v1583, %v1645
      %v1662 = vadd.f32 %v1584, %v1647
      %v1663 = vadd.f32 %v1585, %v1650
      %v1664 = vadd.f32 %v1586, %v1652
      %v1665 = vadd.f32 %v1587, %v1655
      %v1666 = vadd.f32 %v1588, %v1657
      %v1667 = vld [vmem:[#allocation2 + $0xc] sm:$0xf]
      %v1668 = vld [vmem:[#allocation2 + $0x10] sm:$0xf]
      %v1669 = vld [vmem:[#allocation2 + $0x14] sm:$0xf]
      %v1670 = vld [vmem:[#allocation2 + $0x18] sm:$0xf]
      %v1671 = vld [vmem:[#allocation2 + $0x1c] sm:$0xf]
      %v1672 = vld [vmem:[#allocation2 + $0x20] sm:$0xf]
      %v1673 = vld [vmem:[#allocation2 + $0x24] sm:$0xf]
      %v1674 = vld [vmem:[#allocation2 + $0x28] sm:$0xf]
      %v1675 = vld [vmem:[#allocation2 + $0x2c] sm:$0x1]
      %v1676 = vsel %vm920, %v1667, 0
      %v1677 = vsel %vm927, %v1668, 0
      %v1678 = vsel %vm934, %v1669, 0
      %v1679 = vsel %vm941, %v1670, 0
      %v1680 = vsel %vm948, %v1671, 0
      %v1681 = vsel %vm955, %v1672, 0
      %v1682 = vsel %vm962, %v1673, 0
      %v1683 = vsel %vm969, %v1674, 0
      %v1684 = vsel %vm976, %v1675, 0
      %s1685 = scalar_lea.vmem %s248, 64
      %v1686 = vld [vmem:[%s1685] sm:$0xf]
      %v1687 = vld [vmem:[%s1685 + $0x4] sm:$0xf]
      %v1697 = vunpack.c.l.b16 %v1676
      %v1698 = vunpack.c.l.b16 %v1677
      %v1699 = vunpack.c.l.b16 %v1678
      %v1700 = vunpack.c.l.b16 %v1679
      %v1701 = vunpack.c.l.b16 %v1680
      %v1702 = vunpack.c.l.b16 %v1681
      %v1703 = vunpack.c.l.b16 %v1682
      %v1704 = vunpack.c.l.b16 %v1683
      %v1705 = vunpack.c.l.b16 %v1684
      %v1706 = vpack.c.b16 %v1698, %v1697
      %v1707 = vpack.c.b16 %v1700, %v1699
      %v1708 = vpack.c.b16 %v1702, %v1701
      %v1709 = vpack.c.b16 %v1704, %v1703
      %v1710 = vpack.c.b16 %v1705, %v1705
      %v1712 = vshrl.u32 %v1706, 16
      %v1714 = vshll.u32 %v1706, 16
      %v1716 = vrot.slane %v1714, 1
      %v1717 = vor.u32 %v1712, %v1716
      %v1719 = vshll.u32 %v1707, 16
      %v1721 = vrot.slane %v1719, 1
      %v1722 = vsel %vm1012, %v1717, %v1721
      %v1723 = vshrl.u32 %v1707, 16
      %v1725 = vor.u32 %v1723, %v1721
      %v1727 = vshll.u32 %v1708, 16
      %v1729 = vrot.slane %v1727, 1
      %v1730 = vsel %vm1012, %v1725, %v1729
      %v1731 = vshrl.u32 %v1708, 16
      %v1733 = vor.u32 %v1731, %v1729
      %v1735 = vshll.u32 %v1709, 16
      %v1737 = vrot.slane %v1735, 1
      %v1738 = vsel %vm1012, %v1733, %v1737
      %v1739 = vshrl.u32 %v1709, 16
      %v1741 = vor.u32 %v1739, %v1737
      %v1743 = vshll.u32 %v1710, 16
      %v1745 = vrot.slane %v1743, 1
      %v1746 = vsel %vm1012, %v1741, %v1745
      %v1749 = vunpack.c.l.b16 %v1686
      %v1750 = vunpack.c.l.b16 %v1687
      %v1751 = vpack.c.b16 %v1750, %v1749
      %v1754 = vsel %vm642, %v1722, 0
      %v1757 = vsel %vm642, %v1730, 0
      %v1760 = vsel %vm642, %v1738, 0
      %v1763 = vsel %vm642, %v1746, 0
      %1765 = vmatpush.bf16.msra.mxu0 0
      %1766 = vmatpush.bf16.msra.mxu0 0
      %1767 = vmatpush.bf16.msra.mxu0 0
      %1768 = vmatpush.bf16.msra.mxu0 0
      %1769 = vmatpush.bf16.msra.mxu0 0
      %1770 = vmatpush.bf16.msra.mxu0 0
      %1771 = vmatpush.bf16.msra.mxu0 0
      %1772 = vmatpush.bf16.msra.mxu0 %v1751
      %1773 = vmatmul.bf16.gmra.mxu0 %v1754
      %v1774 = vpop.f32.mrf.mxu0
      %v1775 = vadd.f32 0.0, %v1774
      %v1776 = vpop.f32.mrf.mxu0
      %v1777 = vadd.f32 0.0, %v1776
      %1778 = vmatmul.bf16.gmra.mxu0 %v1757
      %v1779 = vpop.f32.mrf.mxu0
      %v1780 = vadd.f32 0.0, %v1779
      %v1781 = vpop.f32.mrf.mxu0
      %v1782 = vadd.f32 0.0, %v1781
      %1783 = vmatmul.bf16.gmra.mxu0 %v1760
      %v1784 = vpop.f32.mrf.mxu0
      %v1785 = vadd.f32 0.0, %v1784
      %v1786 = vpop.f32.mrf.mxu0
      %v1787 = vadd.f32 0.0, %v1786
      %1788 = vmatmul.bf16.gmra.mxu0 %v1763
      %v1789 = vpop.f32.mrf.mxu0
      %v1790 = vadd.f32 0.0, %v1789
      %v1791 = vpop.f32.mrf.mxu0
      %v1792 = vadd.f32 0.0, %v1791
      %1793 = vdwg.mxu0
      %v1794 = vadd.f32 %v1659, %v1775
      %v1795 = vadd.f32 %v1660, %v1777
      %v1796 = vadd.f32 %v1661, %v1780
      %v1797 = vadd.f32 %v1662, %v1782
      %v1798 = vadd.f32 %v1663, %v1785
      %v1799 = vadd.f32 %v1664, %v1787
      %v1800 = vadd.f32 %v1665, %v1790
      %v1801 = vadd.f32 %v1666, %v1792
      %v1802 = vld [vmem:[%s251] sm:$0x1]
      %v1804 = vperm.slane %v1802, 0
      %v1806 = vmul.f32 %v1794, %v1804
      %v1807 = vmul.f32 %v1795, %v1804
      %v1808 = vmul.f32 %v1796, %v1804
      %v1809 = vmul.f32 %v1797, %v1804
      %v1810 = vmul.f32 %v1798, %v1804
      %v1811 = vmul.f32 %v1799, %v1804
      %v1812 = vmul.f32 %v1800, %v1804
      %v1813 = vmul.f32 %v1801, %v1804
      %v1814 = vld [vmem:[%s254] sm:$0x1]
      %v1816 = vperm.slane %v1814, 0
      %v1818 = vadd.f32 %v1806, %v1816
      %v1819 = vadd.f32 %v1807, %v1816
      %v1820 = vadd.f32 %v1808, %v1816
      %v1821 = vadd.f32 %v1809, %v1816
      %v1822 = vadd.f32 %v1810, %v1816
      %v1823 = vadd.f32 %v1811, %v1816
      %v1824 = vadd.f32 %v1812, %v1816
      %v1825 = vadd.f32 %v1813, %v1816
      %v1826 = vmax.f32 %v1818, 0.0
      %v1827 = vmax.f32 %v1819, 0.0
      %v1828 = vmax.f32 %v1820, 0.0
      %v1829 = vmax.f32 %v1821, 0.0
      %v1830 = vmax.f32 %v1822, 0.0
      %v1831 = vmax.f32 %v1823, 0.0
      %v1832 = vmax.f32 %v1824, 0.0
      %v1833 = vmax.f32 %v1825, 0.0
      %v1834 = vpack.c.bf16 %v1826, %v1826
      %v1835 = vpack.c.bf16 %v1827, %v1827
      %v1836 = vpack.c.bf16 %v1828, %v1828
      %v1837 = vpack.c.bf16 %v1829, %v1829
      %v1838 = vpack.c.bf16 %v1830, %v1830
      %v1839 = vpack.c.bf16 %v1831, %v1831
      %v1840 = vpack.c.bf16 %v1832, %v1832
      %v1841 = vpack.c.bf16 %v1833, %v1833
      %vm1842 = vcmask 257024
      %1843 = vst.msk [vmem:[%s262] sm:$0xf] %vm1842, %v1834
      %1844 = vst.msk [vmem:[%s262 + $0x4] sm:$0xf] %vm1842, %v1835
      %1845 = vst.msk [vmem:[%s262 + $0x8] sm:$0xf] %vm1842, %v1836
      %1846 = vst.msk [vmem:[%s262 + $0xc] sm:$0xf] %vm1842, %v1837
      %1847 = vst.msk [vmem:[%s262 + $0x10] sm:$0xf] %vm1842, %v1838
      %1848 = vst.msk [vmem:[%s262 + $0x14] sm:$0xf] %vm1842, %v1839
      %1849 = vst.msk [vmem:[%s262 + $0x18] sm:$0xf] %vm1842, %v1840
      %1850 = vst.msk [vmem:[%s262 + $0x1c] sm:$0xf] %vm1842, %v1841
      %p1851 = scmp.lt.s32.totalorder %s20, 1
      %s1852 = scalar_select %p1851, %s20, 1
      %p1853 = scmp.lt.s32.totalorder %s19, 0
      %s1854 = scalar_select %p1853, %s19, 0
      %s1855 = smul.addr %s1852, 8
      %s1856 = sadd.s32 %s1854, %s1855
      %s1857 = smul.addr %s1856, 4
      %s1858 = scalar_lea.vmem %s4, %s1857
      // Predicated region
      $region37: #{tpu_custom_call.1} parent=35 // pred_check
        %p1859 = pneg %p151
      $region38: #{tpu_custom_call.1} parent=35 // pred_check_branch
        %1861 = sbr.rel (%p1859) target = $region40
      $region39: #{tpu_custom_call.1} parent=35 // pred_region
        _
      $region40: #{tpu_custom_call.1} parent=35 // pred_fallthru
        _
    $region36: #{tpu_custom_call.1} parent=5 // pred_fallthru
      _
    %p1862 = scmp.le.s32.totalorder 2, %s10
    // Predicated region
    $region41: #{tpu_custom_call.1} parent=5 // pred_check
      %p1863 = pneg %p1862
    $region42: #{tpu_custom_call.1} parent=5 // pred_check_branch
      %1865 = sbr.rel (%p1863) target = $region44
    $region43: #{tpu_custom_call.1} parent=5 // pred_region
      %s1866 = ssub.s32 %s10, 2
      // Predicated region
      $region45: #{tpu_custom_call.1} parent=43 // pred_check
        %p1867 = pneg %p157
      $region46: #{tpu_custom_call.1} parent=43 // pred_check_branch
        %1869 = sbr.rel (%p1867) target = $region48
      $region47: #{tpu_custom_call.1} parent=43 // pred_region
        %p1870 = scmp.lt.s32.totalorder %s22, 1
        %s1871 = scalar_select %p1870, %s22, 1
        %p1872 = scmp.lt.s32.totalorder %s21, 0
        %s1873 = scalar_select %p1872, %s21, 0
        %s1874 = smul.addr %s1871, 8
        %s1875 = sadd.s32 %s1873, %s1874
        %s1876 = smul.addr %s1875, 4
        %s1877 = scalar_lea.vmem %s4, %s1876
      $region48: #{tpu_custom_call.1} parent=43 // pred_fallthru
        _
    $region44: #{tpu_custom_call.1} parent=5 // pred_fallthru
      _
  $region6: #{tpu_custom_call.1} parent=0 // loop_footer
    %s14 = sadd.s32 1, %s10
  $region7: #{tpu_custom_call.1} parent=0 // loop_footer_branch
    %9 = sbr.rel target = $region3
  $region8: #{tpu_custom_call.1} parent=0 // loop_exit
    _

</llo_original>
